<compile_context>
chip_gen: v7x
topology: tpu7x:2x2x1
jax: 0.10.0
libtpu: 0.0.40
codegen_flags: <defaults>
</compile_context>

<pallas_src>
import jax
import jax.numpy as jnp
from jax import lax
from jax.experimental import pallas as pl
from jax.experimental.pallas import tpu as pltpu

# On v6e/v7x this can be flipped to jnp.bfloat16 so the big input-projection
# matmul runs on the fast bf16 MXU path (accumulation stays f32).  Kept f32
# here for exact parity with the f32 PyTorch reference.
MATMUL_INPUT_DTYPE = jnp.float32


# ------------------------- fused BiLSTM recurrence --------------------------
def _bilstm_recurrence(x_ref, wih_ref, whh_ref, b_ref, gx_ref, hf_ref, hb_ref):
    """Fused forward+backward LSTM recurrence for one layer.

    x_ref:   (S, Bt, Din)   time-major input
    wih_ref: (Din, 8H)      [wih_fwd.T | wih_bwd.T]       (gate order i,f,g,o)
    whh_ref: (2H, 8H)       block-diag([whh_fwd.T, whh_bwd.T])
    b_ref:   (1, 8H)        [b_ih_f+b_hh_f | b_ih_b+b_hh_b]
    gx_ref:  (S, Bt, 8H)    VMEM scratch: input projection, both directions
    hf_ref:  (S, Bt, H)     VMEM: forward hidden states  (whole-row stores)
    hb_ref:  (S, Bt, H)     VMEM: backward hidden states (whole-row stores)
    """
    S, Bt, Din = x_ref.shape
    H8 = wih_ref.shape[1]
    H = H8 // 8
    H4 = 4 * H

    wih = wih_ref[...]
    whh = whh_ref[...]
    b = b_ref[...]

    # Input projection for all timesteps and BOTH directions in one MXU matmul.
    x2d = x_ref[...].reshape(S * Bt, Din).astype(MATMUL_INPUT_DTYPE)
    gx = jnp.dot(x2d, wih.astype(MATMUL_INPUT_DTYPE),
                 preferred_element_type=jnp.float32)
    gx_ref[...] = (gx + b).reshape(S, Bt, H8)

    def gates(g, c):
        i = jax.nn.sigmoid(g[:, 0 * H:1 * H])
        f = jax.nn.sigmoid(g[:, 1 * H:2 * H])
        gg = jnp.tanh(g[:, 2 * H:3 * H])
        o = jax.nn.sigmoid(g[:, 3 * H:4 * H])
        c_new = f * c + i * gg
        return o * jnp.tanh(c_new), c_new

    def step(t, carry):
        h_cat, c_f, c_b = carry                     # (Bt,2H), (Bt,H), (Bt,H)
        tb = S - 1 - t
        # One matmul covers both directions (block-diagonal whh, no .T inside
        # the loop).
        g_rec = jnp.dot(h_cat, whh, preferred_element_type=jnp.float32)  # (Bt,8H)
        g_f = gx_ref[t][:, 0:H4] + g_rec[:, 0:H4]
        g_b = gx_ref[tb][:, H4:H8] + g_rec[:, H4:H8]
        h_f, c_f = gates(g_f, c_f)
        h_b, c_b = gates(g_b, c_b)
        hf_ref[t] = h_f                             # unmasked whole-row store
        hb_ref[tb] = h_b
        return jnp.concatenate([h_f, h_b], axis=-1), c_f, c_b

    h0 = jnp.zeros((Bt, 2 * H), jnp.float32)
    c0 = jnp.zeros((Bt, H), jnp.float32)
    # Unrolled: the recurrence is latency-bound; unrolling lets the scheduler
    # overlap the next step's gx load / MXU push with this step's VPU/EUP work.
    lax.fori_loop(0, S, step, (h0, c0, c0), unroll=True)


def bilstm_layer_kernel(x_ref, wih_ref, whh_ref, b_ref, out_ref,
                        gx_ref, hf_ref, hb_ref):
    _bilstm_recurrence(x_ref, wih_ref, whh_ref, b_ref, gx_ref, hf_ref, hb_ref)
    out_ref[...] = jnp.concatenate(
        [hf_ref[...], hb_ref[...]], axis=-1).astype(out_ref.dtype)


def bilstm_last_kernel(x_ref, wih_ref, whh_ref, b_ref, mask_ref, wfcT_ref,
                       bfc_ref, out_ref, gx_ref, hf_ref, hb_ref):
    """Last layer: BiLSTM recurrence + attention + Linear fused (no HBM
    round-trip of the (S, Bt, 2H) output)."""
    _bilstm_recurrence(x_ref, wih_ref, whh_ref, b_ref, gx_ref, hf_ref, hb_ref)

    lstm = jnp.concatenate([hf_ref[...], hb_ref[...]], axis=-1)     # (S,Bt,2H)
    mask = mask_ref[...].astype(jnp.float32)                        # (Bt, 2H)

    # scores[s, b] = sum_h lstm[s,b,h] * mask[b,h]   (bmm of the reference)
    # TODO(synk): at non-toy shapes express these two reductions as dot_general
    # batch contractions so they run on the MXU instead of VPU+XLU.
    scores = jnp.sum(lstm * mask[None, :, :], axis=2)               # (S, Bt)
    m = jnp.max(scores, axis=0, keepdims=True)
    e = jnp.exp(scores - m)
    w = e / jnp.sum(e, axis=0, keepdims=True)                       # softmax over S
    attn = jnp.sum(lstm * w[:, :, None], axis=0)                    # (Bt, 2H)

    out = jnp.dot(attn, wfcT_ref[...],
                  preferred_element_type=jnp.float32) + bfc_ref[...]
    out_ref[...] = out.astype(out_ref.dtype)


# ------------------------------- wrappers ------------------------------------
def _batch_tile(B):
    # Sublane-aligned batch tile that divides B; whole batch for toy shapes.
    for bt in (256, 128, 64, 32, 16, 8):
        if B % bt == 0:
            return bt
    return B


def bilstm_layer(x_tm, wih_cat, whh_cat, b_cat):
    S, B, Din = x_tm.shape
    H8 = wih_cat.shape[1]
    H = H8 // 8
    bt = _batch_tile(B)
    return pl.pallas_call(
        bilstm_layer_kernel,
        out_shape=jax.ShapeDtypeStruct((S, B, 2 * H), jnp.float32),
        grid_spec=pltpu.PrefetchScalarGridSpec(
            num_scalar_prefetch=0,
            grid=(B // bt,),
            in_specs=[
                pl.BlockSpec((S, bt, Din), lambda i: (0, i, 0)),
                pl.BlockSpec((Din, H8), lambda i: (0, 0)),
                pl.BlockSpec((2 * H, H8), lambda i: (0, 0)),
                pl.BlockSpec((1, H8), lambda i: (0, 0)),
            ],
            out_specs=pl.BlockSpec((S, bt, 2 * H), lambda i: (0, i, 0)),
            scratch_shapes=[
                pltpu.VMEM((S, bt, H8), jnp.float32),   # gx
                pltpu.VMEM((S, bt, H), jnp.float32),    # forward h sequence
                pltpu.VMEM((S, bt, H), jnp.float32),    # backward h sequence
            ],
        ),
        compiler_params=pltpu.CompilerParams(
            dimension_semantics=("parallel",)),
    )(x_tm, wih_cat, whh_cat, b_cat)


def bilstm_last_layer(x_tm, wih_cat, whh_cat, b_cat, mask, wfc_T, bfc):
    S, B, Din = x_tm.shape
    H8 = wih_cat.shape[1]
    H = H8 // 8
    O = wfc_T.shape[1]
    bt = _batch_tile(B)
    return pl.pallas_call(
        bilstm_last_kernel,
        out_shape=jax.ShapeDtypeStruct((B, O), jnp.float32),
        grid_spec=pltpu.PrefetchScalarGridSpec(
            num_scalar_prefetch=0,
            grid=(B // bt,),
            in_specs=[
                pl.BlockSpec((S, bt, Din), lambda i: (0, i, 0)),
                pl.BlockSpec((Din, H8), lambda i: (0, 0)),
                pl.BlockSpec((2 * H, H8), lambda i: (0, 0)),
                pl.BlockSpec((1, H8), lambda i: (0, 0)),
                pl.BlockSpec((bt, 2 * H), lambda i: (i, 0)),
                pl.BlockSpec((2 * H, O), lambda i: (0, 0)),
                pl.BlockSpec((1, O), lambda i: (0, 0)),
            ],
            out_specs=pl.BlockSpec((bt, O), lambda i: (i, 0)),
            scratch_shapes=[
                pltpu.VMEM((S, bt, H8), jnp.float32),   # gx
                pltpu.VMEM((S, bt, H), jnp.float32),    # forward h sequence
                pltpu.VMEM((S, bt, H), jnp.float32),    # backward h sequence
            ],
        ),
        compiler_params=pltpu.CompilerParams(
            dimension_semantics=("parallel",)),
    )(x_tm, wih_cat, whh_cat, b_cat, mask, wfc_T, bfc)


# --------------------------- parameter setup ---------------------------------
def init_params(key, vocab_size, E, H, num_layers, O):
    keys = jax.random.split(key, 2 + num_layers)
    emb = jax.random.normal(keys[0], (vocab_size, E), jnp.float32)

    bound = float(1.0 / (H ** 0.5))

    def u(k, shape, b):
        return jax.random.uniform(k, shape, jnp.float32, -b, b)

    lstm_params = []
    for l in range(num_layers):
        din = E if l == 0 else 2 * H
        ks = jax.random.split(keys[2 + l], 8)
        wih_f = u(ks[0], (4 * H, din), bound)
        whh_f = u(ks[1], (4 * H, H), bound)
        b_f = u(ks[2], (1, 4 * H), bound) + u(ks[3], (1, 4 * H), bound)  # b_ih+b_hh
        wih_b = u(ks[4], (4 * H, din), bound)
        whh_b = u(ks[5], (4 * H, H), bound)
        b_b = u(ks[6], (1, 4 * H), bound) + u(ks[7], (1, 4 * H), bound)
        lstm_params.append((wih_f, whh_f, b_f, wih_b, whh_b, b_b))

    kfc = jax.random.split(keys[1], 2)
    fbound = float(1.0 / ((2 * H) ** 0.5))
    wfc = u(kfc[0], (O, 2 * H), fbound)
    bfc = u(kfc[1], (1, O), fbound)
    return emb, lstm_params, wfc, bfc


def pack_layer_params(wih_f, whh_f, b_f, wih_b, whh_b, b_b):
    """Pre-transpose and pack both directions so the kernels never transpose."""
    H4, H = whh_f.shape
    H8 = 2 * H4
    wih_cat = jnp.concatenate([wih_f.T, wih_b.T], axis=1)            # (Din, 8H)
    whh_cat = jnp.zeros((2 * H, H8), jnp.float32)
    whh_cat = whh_cat.at[:H, :H4].set(whh_f.T)                       # block-diag
    whh_cat = whh_cat.at[H:, H4:].set(whh_b.T)
    b_cat = jnp.concatenate([b_f, b_b], axis=1)                      # (1, 8H)
    return wih_cat, whh_cat, b_cat


# ------------------------------ forward pass ---------------------------------
def bilstm_forward(text, mask, emb, lstm_params, wfc, bfc):
    # Embedding lookup (glue) + dropout.
    x = jnp.take(emb, text, axis=0)                     # (B, S, E) float32
    # TODO(synk): nn.Dropout is identity in eval mode; training-mode RNG dropout not implemented.
    x = jnp.transpose(x, (1, 0, 2))                     # time-major (S, B, E)

    packed = [pack_layer_params(*p) for p in lstm_params]
    for wih_cat, whh_cat, b_cat in packed[:-1]:
        x = bilstm_layer(x, wih_cat, whh_cat, b_cat)    # (S, B, 2H), time-major

    wih_cat, whh_cat, b_cat = packed[-1]
    return bilstm_last_layer(x, wih_cat, whh_cat, b_cat, mask, wfc.T, bfc)


if __name__ == "__main__":
    vocab_size, embedding_dim, hidden_dim = 50, 16, 16
    num_layers, output_dim, dropout = 2, 4, 0.1
    B, S = 2, 8

    key = jax.random.PRNGKey(0)
    k_param, k_text, k_mask = jax.random.split(key, 3)

    emb, lstm_params, wfc, bfc = init_params(
        k_param, vocab_size, embedding_dim, hidden_dim, num_layers, output_dim)

    text = jax.random.randint(k_text, (B, S), 0, vocab_size, dtype=jnp.int32)
    text_attention_mask = jax.random.uniform(
        k_mask, (B, 2 * hidden_dim), jnp.float32)

    out = bilstm_forward(text, text_attention_mask, emb, lstm_params, wfc, bfc)
    out = jax.block_until_ready(out)
    assert out.shape == (B, output_dim) and out.dtype == jnp.float32
    print("KERNEL_OK")
</pallas_src>

<mosaic_0001>
module attributes {stable_mosaic.version = 11 : i64} {
  func.func @bilstm_layer_kernel(%arg0: i32, %arg1: memref<8x2x16xf32, #tpu.memory_space<vmem>>, %arg2: memref<16x128xf32, #tpu.memory_space<vmem>>, %arg3: memref<32x128xf32, #tpu.memory_space<vmem>>, %arg4: memref<1x128xf32, #tpu.memory_space<vmem>>, %arg5: memref<8x2x32xf32, #tpu.memory_space<vmem>>, %arg6: memref<8x2x128xf32, #tpu.memory_space<vmem>>, %arg7: memref<8x2x16xf32, #tpu.memory_space<vmem>>, %arg8: memref<8x2x16xf32, #tpu.memory_space<vmem>>) attributes {dimension_semantics = [#tpu.dimension_semantics<parallel>], iteration_bounds = array<i64: 1>, scalar_prefetch = 0 : i64, scratch_operands = 3 : i64, tpu.core_type = #tpu.core_type<tc>, window_params = [{transform_indices = @transform_0, window_bounds = array<i64: 8, 2, 16>}, {pipeline_mode = #tpu.pipeline_mode<synchronous>, transform_indices = @transform_1, window_bounds = array<i64: 16, 128>}, {pipeline_mode = #tpu.pipeline_mode<synchronous>, transform_indices = @transform_2, window_bounds = array<i64: 32, 128>}, {pipeline_mode = #tpu.pipeline_mode<synchronous>, transform_indices = @transform_3, window_bounds = array<i64: 1, 128>}, {transform_indices = @transform_4, window_bounds = array<i64: 8, 2, 32>}]} {
    %c0 = arith.constant 0 : index
    %c0_0 = arith.constant 0 : index
    %0 = vector.load %arg2[%c0, %c0_0] : memref<16x128xf32, #tpu.memory_space<vmem>>, vector<16x128xf32>
    %c0_1 = arith.constant 0 : index
    %c0_2 = arith.constant 0 : index
    %1 = vector.load %arg3[%c0_1, %c0_2] : memref<32x128xf32, #tpu.memory_space<vmem>>, vector<32x128xf32>
    %c0_3 = arith.constant 0 : index
    %c0_4 = arith.constant 0 : index
    %2 = vector.load %arg4[%c0_3, %c0_4] : memref<1x128xf32, #tpu.memory_space<vmem>>, vector<1x128xf32>
    %c0_5 = arith.constant 0 : index
    %c0_6 = arith.constant 0 : index
    %c0_7 = arith.constant 0 : index
    %3 = vector.load %arg1[%c0_5, %c0_6, %c0_7] : memref<8x2x16xf32, #tpu.memory_space<vmem>>, vector<8x2x16xf32>
    %4 = vector.shape_cast %3 : vector<8x2x16xf32> to vector<16x16xf32>
    %cst = arith.constant dense<0.000000e+00> : vector<16x128xf32>
    %5 = tpu.matmul %4, %0, %cst {dimension_numbers = #tpu.dot_dimension_numbers<[1], [0], [0], [1], [0, 0, 1, 1], [], []>} : vector<16x16xf32>, vector<16x128xf32>, vector<16x128xf32> -> vector<16x128xf32>
    %6 = vector.broadcast %2 : vector<1x128xf32> to vector<16x128xf32>
    %7 = arith.addf %5, %6 : vector<16x128xf32>
    %8 = vector.shape_cast %7 : vector<16x128xf32> to vector<8x2x128xf32>
    %c0_8 = arith.constant 0 : index
    %c0_9 = arith.constant 0 : index
    %c0_10 = arith.constant 0 : index
    %9 = vector.load %arg6[%c0_8, %c0_9, %c0_10] : memref<8x2x128xf32, #tpu.memory_space<vmem>>, vector<8x2x128xf32>
    tpu.vector_store %arg6[%c0_8, %c0_9, %c0_10], %8 {strides = array<i32>} : memref<8x2x128xf32, #tpu.memory_space<vmem>>, vector<8x2x128xf32>,
    %cst_11 = arith.constant 0.000000e+00 : f32
    %10 = vector.broadcast %cst_11 : f32 to vector<2x32xf32>
    %cst_12 = arith.constant 0.000000e+00 : f32
    %11 = vector.broadcast %cst_12 : f32 to vector<2x16xf32>
    %c0_i32 = arith.constant 0 : i32
    %c7_i32 = arith.constant 7 : i32
    %12 = arith.subi %c7_i32, %c0_i32 : i32
    %cst_13 = arith.constant dense<0.000000e+00> : vector<2x128xf32>
    %13 = tpu.matmul %10, %1, %cst_13 {dimension_numbers = #tpu.dot_dimension_numbers<[1], [0], [0], [1], [0, 0, 1, 1], [], []>} : vector<2x32xf32>, vector<32x128xf32>, vector<2x128xf32> -> vector<2x128xf32>
    %14 = arith.index_cast %c0_i32 : i32 to index
    %c0_14 = arith.constant 0 : index
    %c0_15 = arith.constant 0 : index
    %15 = vector.load %arg6[%14, %c0_14, %c0_15] : memref<8x2x128xf32, #tpu.memory_space<vmem>>, vector<1x2x128xf32>
    %16 = vector.shape_cast %15 : vector<1x2x128xf32> to vector<2x128xf32>
    %17 = vector.extract_strided_slice %16 {offsets = [0, 0], sizes = [2, 64], strides = [1, 1]} : vector<2x128xf32> to vector<2x64xf32>
    %18 = vector.extract_strided_slice %13 {offsets = [0, 0], sizes = [2, 64], strides = [1, 1]} : vector<2x128xf32> to vector<2x64xf32>
    %19 = arith.addf %17, %18 : vector<2x64xf32>
    %20 = arith.index_cast %12 : i32 to index
    %c0_16 = arith.constant 0 : index
    %c0_17 = arith.constant 0 : index
    %21 = vector.load %arg6[%20, %c0_16, %c0_17] : memref<8x2x128xf32, #tpu.memory_space<vmem>>, vector<1x2x128xf32>
    %22 = vector.shape_cast %21 : vector<1x2x128xf32> to vector<2x128xf32>
    %23 = vector.extract_strided_slice %22 {offsets = [0, 64], sizes = [2, 64], strides = [1, 1]} : vector<2x128xf32> to vector<2x64xf32>
    %24 = vector.extract_strided_slice %13 {offsets = [0, 64], sizes = [2, 64], strides = [1, 1]} : vector<2x128xf32> to vector<2x64xf32>
    %25 = arith.addf %23, %24 : vector<2x64xf32>
    %26 = vector.extract_strided_slice %19 {offsets = [0, 0], sizes = [2, 16], strides = [1, 1]} : vector<2x64xf32> to vector<2x16xf32>
    %27 = arith.negf %26 : vector<2x16xf32>
    %28 = math.exp %27 : vector<2x16xf32>
    %cst_18 = arith.constant 1.000000e+00 : f32
    %29 = vector.broadcast %cst_18 : f32 to vector<2x16xf32>
    %30 = arith.addf %29, %28 : vector<2x16xf32>
    %31 = arith.divf %29, %30 : vector<2x16xf32>
    %32 = vector.extract_strided_slice %19 {offsets = [0, 16], sizes = [2, 16], strides = [1, 1]} : vector<2x64xf32> to vector<2x16xf32>
    %33 = arith.negf %32 : vector<2x16xf32>
    %34 = math.exp %33 : vector<2x16xf32>
    %cst_19 = arith.constant 1.000000e+00 : f32
    %35 = vector.broadcast %cst_19 : f32 to vector<2x16xf32>
    %36 = arith.addf %35, %34 : vector<2x16xf32>
    %37 = arith.divf %35, %36 : vector<2x16xf32>
    %38 = vector.extract_strided_slice %19 {offsets = [0, 32], sizes = [2, 16], strides = [1, 1]} : vector<2x64xf32> to vector<2x16xf32>
    %39 = math.tanh %38 : vector<2x16xf32>
    %40 = vector.extract_strided_slice %19 {offsets = [0, 48], sizes = [2, 16], strides = [1, 1]} : vector<2x64xf32> to vector<2x16xf32>
    %41 = arith.negf %40 : vector<2x16xf32>
    %42 = math.exp %41 : vector<2x16xf32>
    %cst_20 = arith.constant 1.000000e+00 : f32
    %43 = vector.broadcast %cst_20 : f32 to vector<2x16xf32>
    %44 = arith.addf %43, %42 : vector<2x16xf32>
    %45 = arith.divf %43, %44 : vector<2x16xf32>
    %46 = arith.mulf %37, %11 : vector<2x16xf32>
    %47 = arith.mulf %31, %39 : vector<2x16xf32>
    %48 = arith.addf %46, %47 : vector<2x16xf32>
    %49 = math.tanh %48 : vector<2x16xf32>
    %50 = arith.mulf %45, %49 : vector<2x16xf32>
    %51 = vector.extract_strided_slice %25 {offsets = [0, 0], sizes = [2, 16], strides = [1, 1]} : vector<2x64xf32> to vector<2x16xf32>
    %52 = arith.negf %51 : vector<2x16xf32>
    %53 = math.exp %52 : vector<2x16xf32>
    %cst_21 = arith.constant 1.000000e+00 : f32
    %54 = vector.broadcast %cst_21 : f32 to vector<2x16xf32>
    %55 = arith.addf %54, %53 : vector<2x16xf32>
    %56 = arith.divf %54, %55 : vector<2x16xf32>
    %57 = vector.extract_strided_slice %25 {offsets = [0, 16], sizes = [2, 16], strides = [1, 1]} : vector<2x64xf32> to vector<2x16xf32>
    %58 = arith.negf %57 : vector<2x16xf32>
    %59 = math.exp %58 : vector<2x16xf32>
    %cst_22 = arith.constant 1.000000e+00 : f32
    %60 = vector.broadcast %cst_22 : f32 to vector<2x16xf32>
    %61 = arith.addf %60, %59 : vector<2x16xf32>
    %62 = arith.divf %60, %61 : vector<2x16xf32>
    %63 = vector.extract_strided_slice %25 {offsets = [0, 32], sizes = [2, 16], strides = [1, 1]} : vector<2x64xf32> to vector<2x16xf32>
    %64 = math.tanh %63 : vector<2x16xf32>
    %65 = vector.extract_strided_slice %25 {offsets = [0, 48], sizes = [2, 16], strides = [1, 1]} : vector<2x64xf32> to vector<2x16xf32>
    %66 = arith.negf %65 : vector<2x16xf32>
    %67 = math.exp %66 : vector<2x16xf32>
    %cst_23 = arith.constant 1.000000e+00 : f32
    %68 = vector.broadcast %cst_23 : f32 to vector<2x16xf32>
    %69 = arith.addf %68, %67 : vector<2x16xf32>
    %70 = arith.divf %68, %69 : vector<2x16xf32>
    %71 = arith.mulf %62, %11 : vector<2x16xf32>
    %72 = arith.mulf %56, %64 : vector<2x16xf32>
    %73 = arith.addf %71, %72 : vector<2x16xf32>
    %74 = math.tanh %73 : vector<2x16xf32>
    %75 = arith.mulf %70, %74 : vector<2x16xf32>
    %76 = arith.index_cast %c0_i32 : i32 to index
    %c0_24 = arith.constant 0 : index
    %c0_25 = arith.constant 0 : index
    %77 = vector.load %arg7[%76, %c0_24, %c0_25] : memref<8x2x16xf32, #tpu.memory_space<vmem>>, vector<1x2x16xf32>
    %78 = vector.shape_cast %77 : vector<1x2x16xf32> to vector<2x16xf32>
    %79 = vector.shape_cast %50 : vector<2x16xf32> to vector<1x2x16xf32>
    tpu.vector_store %arg7[%76, %c0_24, %c0_25], %79 {strides = array<i32>} : memref<8x2x16xf32, #tpu.memory_space<vmem>>, vector<1x2x16xf32>,
    %80 = arith.index_cast %12 : i32 to index
    %c0_26 = arith.constant 0 : index
    %c0_27 = arith.constant 0 : index
    %81 = vector.load %arg8[%80, %c0_26, %c0_27] : memref<8x2x16xf32, #tpu.memory_space<vmem>>, vector<1x2x16xf32>
    %82 = vector.shape_cast %81 : vector<1x2x16xf32> to vector<2x16xf32>
    %83 = vector.shape_cast %75 : vector<2x16xf32> to vector<1x2x16xf32>
    tpu.vector_store %arg8[%80, %c0_26, %c0_27], %83 {strides = array<i32>} : memref<8x2x16xf32, #tpu.memory_space<vmem>>, vector<1x2x16xf32>,
    %84 = tpu.concatenate %50, %75 in 1 : vector<2x16xf32>, vector<2x16xf32> -> vector<2x32xf32>
    %c1_i32 = arith.constant 1 : i32
    %c7_i32_28 = arith.constant 7 : i32
    %85 = arith.subi %c7_i32_28, %c1_i32 : i32
    %cst_29 = arith.constant dense<0.000000e+00> : vector<2x128xf32>
    %86 = tpu.matmul %84, %1, %cst_29 {dimension_numbers = #tpu.dot_dimension_numbers<[1], [0], [0], [1], [0, 0, 1, 1], [], []>} : vector<2x32xf32>, vector<32x128xf32>, vector<2x128xf32> -> vector<2x128xf32>
    %87 = arith.index_cast %c1_i32 : i32 to index
    %c0_30 = arith.constant 0 : index
    %c0_31 = arith.constant 0 : index
    %88 = vector.load %arg6[%87, %c0_30, %c0_31] : memref<8x2x128xf32, #tpu.memory_space<vmem>>, vector<1x2x128xf32>
    %89 = vector.shape_cast %88 : vector<1x2x128xf32> to vector<2x128xf32>
    %90 = vector.extract_strided_slice %89 {offsets = [0, 0], sizes = [2, 64], strides = [1, 1]} : vector<2x128xf32> to vector<2x64xf32>
    %91 = vector.extract_strided_slice %86 {offsets = [0, 0], sizes = [2, 64], strides = [1, 1]} : vector<2x128xf32> to vector<2x64xf32>
    %92 = arith.addf %90, %91 : vector<2x64xf32>
    %93 = arith.index_cast %85 : i32 to index
    %c0_32 = arith.constant 0 : index
    %c0_33 = arith.constant 0 : index
    %94 = vector.load %arg6[%93, %c0_32, %c0_33] : memref<8x2x128xf32, #tpu.memory_space<vmem>>, vector<1x2x128xf32>
    %95 = vector.shape_cast %94 : vector<1x2x128xf32> to vector<2x128xf32>
    %96 = vector.extract_strided_slice %95 {offsets = [0, 64], sizes = [2, 64], strides = [1, 1]} : vector<2x128xf32> to vector<2x64xf32>
    %97 = vector.extract_strided_slice %86 {offsets = [0, 64], sizes = [2, 64], strides = [1, 1]} : vector<2x128xf32> to vector<2x64xf32>
    %98 = arith.addf %96, %97 : vector<2x64xf32>
    %99 = vector.extract_strided_slice %92 {offsets = [0, 0], sizes = [2, 16], strides = [1, 1]} : vector<2x64xf32> to vector<2x16xf32>
    %100 = arith.negf %99 : vector<2x16xf32>
    %101 = math.exp %100 : vector<2x16xf32>
    %cst_34 = arith.constant 1.000000e+00 : f32
    %102 = vector.broadcast %cst_34 : f32 to vector<2x16xf32>
    %103 = arith.addf %102, %101 : vector<2x16xf32>
    %104 = arith.divf %102, %103 : vector<2x16xf32>
    %105 = vector.extract_strided_slice %92 {offsets = [0, 16], sizes = [2, 16], strides = [1, 1]} : vector<2x64xf32> to vector<2x16xf32>
    %106 = arith.negf %105 : vector<2x16xf32>
    %107 = math.exp %106 : vector<2x16xf32>
    %cst_35 = arith.constant 1.000000e+00 : f32
    %108 = vector.broadcast %cst_35 : f32 to vector<2x16xf32>
    %109 = arith.addf %108, %107 : vector<2x16xf32>
    %110 = arith.divf %108, %109 : vector<2x16xf32>
    %111 = vector.extract_strided_slice %92 {offsets = [0, 32], sizes = [2, 16], strides = [1, 1]} : vector<2x64xf32> to vector<2x16xf32>
    %112 = math.tanh %111 : vector<2x16xf32>
    %113 = vector.extract_strided_slice %92 {offsets = [0, 48], sizes = [2, 16], strides = [1, 1]} : vector<2x64xf32> to vector<2x16xf32>
    %114 = arith.negf %113 : vector<2x16xf32>
    %115 = math.exp %114 : vector<2x16xf32>
    %cst_36 = arith.constant 1.000000e+00 : f32
    %116 = vector.broadcast %cst_36 : f32 to vector<2x16xf32>
    %117 = arith.addf %116, %115 : vector<2x16xf32>
    %118 = arith.divf %116, %117 : vector<2x16xf32>
    %119 = arith.mulf %110, %48 : vector<2x16xf32>
    %120 = arith.mulf %104, %112 : vector<2x16xf32>
    %121 = arith.addf %119, %120 : vector<2x16xf32>
    %122 = math.tanh %121 : vector<2x16xf32>
    %123 = arith.mulf %118, %122 : vector<2x16xf32>
    %124 = vector.extract_strided_slice %98 {offsets = [0, 0], sizes = [2, 16], strides = [1, 1]} : vector<2x64xf32> to vector<2x16xf32>
    %125 = arith.negf %124 : vector<2x16xf32>
    %126 = math.exp %125 : vector<2x16xf32>
    %cst_37 = arith.constant 1.000000e+00 : f32
    %127 = vector.broadcast %cst_37 : f32 to vector<2x16xf32>
    %128 = arith.addf %127, %126 : vector<2x16xf32>
    %129 = arith.divf %127, %128 : vector<2x16xf32>
    %130 = vector.extract_strided_slice %98 {offsets = [0, 16], sizes = [2, 16], strides = [1, 1]} : vector<2x64xf32> to vector<2x16xf32>
    %131 = arith.negf %130 : vector<2x16xf32>
    %132 = math.exp %131 : vector<2x16xf32>
    %cst_38 = arith.constant 1.000000e+00 : f32
    %133 = vector.broadcast %cst_38 : f32 to vector<2x16xf32>
    %134 = arith.addf %133, %132 : vector<2x16xf32>
    %135 = arith.divf %133, %134 : vector<2x16xf32>
    %136 = vector.extract_strided_slice %98 {offsets = [0, 32], sizes = [2, 16], strides = [1, 1]} : vector<2x64xf32> to vector<2x16xf32>
    %137 = math.tanh %136 : vector<2x16xf32>
    %138 = vector.extract_strided_slice %98 {offsets = [0, 48], sizes = [2, 16], strides = [1, 1]} : vector<2x64xf32> to vector<2x16xf32>
    %139 = arith.negf %138 : vector<2x16xf32>
    %140 = math.exp %139 : vector<2x16xf32>
    %cst_39 = arith.constant 1.000000e+00 : f32
    %141 = vector.broadcast %cst_39 : f32 to vector<2x16xf32>
    %142 = arith.addf %141, %140 : vector<2x16xf32>
    %143 = arith.divf %141, %142 : vector<2x16xf32>
    %144 = arith.mulf %135, %73 : vector<2x16xf32>
    %145 = arith.mulf %129, %137 : vector<2x16xf32>
    %146 = arith.addf %144, %145 : vector<2x16xf32>
    %147 = math.tanh %146 : vector<2x16xf32>
    %148 = arith.mulf %143, %147 : vector<2x16xf32>
    %149 = arith.index_cast %c1_i32 : i32 to index
    %c0_40 = arith.constant 0 : index
    %c0_41 = arith.constant 0 : index
    %150 = vector.load %arg7[%149, %c0_40, %c0_41] : memref<8x2x16xf32, #tpu.memory_space<vmem>>, vector<1x2x16xf32>
    %151 = vector.shape_cast %150 : vector<1x2x16xf32> to vector<2x16xf32>
    %152 = vector.shape_cast %123 : vector<2x16xf32> to vector<1x2x16xf32>
    tpu.vector_store %arg7[%149, %c0_40, %c0_41], %152 {strides = array<i32>} : memref<8x2x16xf32, #tpu.memory_space<vmem>>, vector<1x2x16xf32>,
    %153 = arith.index_cast %85 : i32 to index
    %c0_42 = arith.constant 0 : index
    %c0_43 = arith.constant 0 : index
    %154 = vector.load %arg8[%153, %c0_42, %c0_43] : memref<8x2x16xf32, #tpu.memory_space<vmem>>, vector<1x2x16xf32>
    %155 = vector.shape_cast %154 : vector<1x2x16xf32> to vector<2x16xf32>
    %156 = vector.shape_cast %148 : vector<2x16xf32> to vector<1x2x16xf32>
    tpu.vector_store %arg8[%153, %c0_42, %c0_43], %156 {strides = array<i32>} : memref<8x2x16xf32, #tpu.memory_space<vmem>>, vector<1x2x16xf32>,
    %157 = tpu.concatenate %123, %148 in 1 : vector<2x16xf32>, vector<2x16xf32> -> vector<2x32xf32>
    %c2_i32 = arith.constant 2 : i32
    %c7_i32_44 = arith.constant 7 : i32
    %158 = arith.subi %c7_i32_44, %c2_i32 : i32
    %cst_45 = arith.constant dense<0.000000e+00> : vector<2x128xf32>
    %159 = tpu.matmul %157, %1, %cst_45 {dimension_numbers = #tpu.dot_dimension_numbers<[1], [0], [0], [1], [0, 0, 1, 1], [], []>} : vector<2x32xf32>, vector<32x128xf32>, vector<2x128xf32> -> vector<2x128xf32>
    %160 = arith.index_cast %c2_i32 : i32 to index
    %c0_46 = arith.constant 0 : index
    %c0_47 = arith.constant 0 : index
    %161 = vector.load %arg6[%160, %c0_46, %c0_47] : memref<8x2x128xf32, #tpu.memory_space<vmem>>, vector<1x2x128xf32>
    %162 = vector.shape_cast %161 : vector<1x2x128xf32> to vector<2x128xf32>
    %163 = vector.extract_strided_slice %162 {offsets = [0, 0], sizes = [2, 64], strides = [1, 1]} : vector<2x128xf32> to vector<2x64xf32>
    %164 = vector.extract_strided_slice %159 {offsets = [0, 0], sizes = [2, 64], strides = [1, 1]} : vector<2x128xf32> to vector<2x64xf32>
    %165 = arith.addf %163, %164 : vector<2x64xf32>
    %166 = arith.index_cast %158 : i32 to index
    %c0_48 = arith.constant 0 : index
    %c0_49 = arith.constant 0 : index
    %167 = vector.load %arg6[%166, %c0_48, %c0_49] : memref<8x2x128xf32, #tpu.memory_space<vmem>>, vector<1x2x128xf32>
    %168 = vector.shape_cast %167 : vector<1x2x128xf32> to vector<2x128xf32>
    %169 = vector.extract_strided_slice %168 {offsets = [0, 64], sizes = [2, 64], strides = [1, 1]} : vector<2x128xf32> to vector<2x64xf32>
    %170 = vector.extract_strided_slice %159 {offsets = [0, 64], sizes = [2, 64], strides = [1, 1]} : vector<2x128xf32> to vector<2x64xf32>
    %171 = arith.addf %169, %170 : vector<2x64xf32>
    %172 = vector.extract_strided_slice %165 {offsets = [0, 0], sizes = [2, 16], strides = [1, 1]} : vector<2x64xf32> to vector<2x16xf32>
    %173 = arith.negf %172 : vector<2x16xf32>
    %174 = math.exp %173 : vector<2x16xf32>
    %cst_50 = arith.constant 1.000000e+00 : f32
    %175 = vector.broadcast %cst_50 : f32 to vector<2x16xf32>
    %176 = arith.addf %175, %174 : vector<2x16xf32>
    %177 = arith.divf %175, %176 : vector<2x16xf32>
    %178 = vector.extract_strided_slice %165 {offsets = [0, 16], sizes = [2, 16], strides = [1, 1]} : vector<2x64xf32> to vector<2x16xf32>
    %179 = arith.negf %178 : vector<2x16xf32>
    %180 = math.exp %179 : vector<2x16xf32>
    %cst_51 = arith.constant 1.000000e+00 : f32
    %181 = vector.broadcast %cst_51 : f32 to vector<2x16xf32>
    %182 = arith.addf %181, %180 : vector<2x16xf32>
    %183 = arith.divf %181, %182 : vector<2x16xf32>
    %184 = vector.extract_strided_slice %165 {offsets = [0, 32], sizes = [2, 16], strides = [1, 1]} : vector<2x64xf32> to vector<2x16xf32>
    %185 = math.tanh %184 : vector<2x16xf32>
    %186 = vector.extract_strided_slice %165 {offsets = [0, 48], sizes = [2, 16], strides = [1, 1]} : vector<2x64xf32> to vector<2x16xf32>
    %187 = arith.negf %186 : vector<2x16xf32>
    %188 = math.exp %187 : vector<2x16xf32>
    %cst_52 = arith.constant 1.000000e+00 : f32
    %189 = vector.broadcast %cst_52 : f32 to vector<2x16xf32>
    %190 = arith.addf %189, %188 : vector<2x16xf32>
    %191 = arith.divf %189, %190 : vector<2x16xf32>
    %192 = arith.mulf %183, %121 : vector<2x16xf32>
    %193 = arith.mulf %177, %185 : vector<2x16xf32>
    %194 = arith.addf %192, %193 : vector<2x16xf32>
    %195 = math.tanh %194 : vector<2x16xf32>
    %196 = arith.mulf %191, %195 : vector<2x16xf32>
    %197 = vector.extract_strided_slice %171 {offsets = [0, 0], sizes = [2, 16], strides = [1, 1]} : vector<2x64xf32> to vector<2x16xf32>
    %198 = arith.negf %197 : vector<2x16xf32>
    %199 = math.exp %198 : vector<2x16xf32>
    %cst_53 = arith.constant 1.000000e+00 : f32
    %200 = vector.broadcast %cst_53 : f32 to vector<2x16xf32>
    %201 = arith.addf %200, %199 : vector<2x16xf32>
    %202 = arith.divf %200, %201 : vector<2x16xf32>
    %203 = vector.extract_strided_slice %171 {offsets = [0, 16], sizes = [2, 16], strides = [1, 1]} : vector<2x64xf32> to vector<2x16xf32>
    %204 = arith.negf %203 : vector<2x16xf32>
    %205 = math.exp %204 : vector<2x16xf32>
    %cst_54 = arith.constant 1.000000e+00 : f32
    %206 = vector.broadcast %cst_54 : f32 to vector<2x16xf32>
    %207 = arith.addf %206, %205 : vector<2x16xf32>
    %208 = arith.divf %206, %207 : vector<2x16xf32>
    %209 = vector.extract_strided_slice %171 {offsets = [0, 32], sizes = [2, 16], strides = [1, 1]} : vector<2x64xf32> to vector<2x16xf32>
    %210 = math.tanh %209 : vector<2x16xf32>
    %211 = vector.extract_strided_slice %171 {offsets = [0, 48], sizes = [2, 16], strides = [1, 1]} : vector<2x64xf32> to vector<2x16xf32>
    %212 = arith.negf %211 : vector<2x16xf32>
    %213 = math.exp %212 : vector<2x16xf32>
    %cst_55 = arith.constant 1.000000e+00 : f32
    %214 = vector.broadcast %cst_55 : f32 to vector<2x16xf32>
    %215 = arith.addf %214, %213 : vector<2x16xf32>
    %216 = arith.divf %214, %215 : vector<2x16xf32>
    %217 = arith.mulf %208, %146 : vector<2x16xf32>
    %218 = arith.mulf %202, %210 : vector<2x16xf32>
    %219 = arith.addf %217, %218 : vector<2x16xf32>
    %220 = math.tanh %219 : vector<2x16xf32>
    %221 = arith.mulf %216, %220 : vector<2x16xf32>
    %222 = arith.index_cast %c2_i32 : i32 to index
    %c0_56 = arith.constant 0 : index
    %c0_57 = arith.constant 0 : index
    %223 = vector.load %arg7[%222, %c0_56, %c0_57] : memref<8x2x16xf32, #tpu.memory_space<vmem>>, vector<1x2x16xf32>
    %224 = vector.shape_cast %223 : vector<1x2x16xf32> to vector<2x16xf32>
    %225 = vector.shape_cast %196 : vector<2x16xf32> to vector<1x2x16xf32>
    tpu.vector_store %arg7[%222, %c0_56, %c0_57], %225 {strides = array<i32>} : memref<8x2x16xf32, #tpu.memory_space<vmem>>, vector<1x2x16xf32>,
    %226 = arith.index_cast %158 : i32 to index
    %c0_58 = arith.constant 0 : index
    %c0_59 = arith.constant 0 : index
    %227 = vector.load %arg8[%226, %c0_58, %c0_59] : memref<8x2x16xf32, #tpu.memory_space<vmem>>, vector<1x2x16xf32>
    %228 = vector.shape_cast %227 : vector<1x2x16xf32> to vector<2x16xf32>
    %229 = vector.shape_cast %221 : vector<2x16xf32> to vector<1x2x16xf32>
    tpu.vector_store %arg8[%226, %c0_58, %c0_59], %229 {strides = array<i32>} : memref<8x2x16xf32, #tpu.memory_space<vmem>>, vector<1x2x16xf32>,
    %230 = tpu.concatenate %196, %221 in 1 : vector<2x16xf32>, vector<2x16xf32> -> vector<2x32xf32>
    %c3_i32 = arith.constant 3 : i32
    %c7_i32_60 = arith.constant 7 : i32
    %231 = arith.subi %c7_i32_60, %c3_i32 : i32
    %cst_61 = arith.constant dense<0.000000e+00> : vector<2x128xf32>
    %232 = tpu.matmul %230, %1, %cst_61 {dimension_numbers = #tpu.dot_dimension_numbers<[1], [0], [0], [1], [0, 0, 1, 1], [], []>} : vector<2x32xf32>, vector<32x128xf32>, vector<2x128xf32> -> vector<2x128xf32>
    %233 = arith.index_cast %c3_i32 : i32 to index
    %c0_62 = arith.constant 0 : index
    %c0_63 = arith.constant 0 : index
    %234 = vector.load %arg6[%233, %c0_62, %c0_63] : memref<8x2x128xf32, #tpu.memory_space<vmem>>, vector<1x2x128xf32>
    %235 = vector.shape_cast %234 : vector<1x2x128xf32> to vector<2x128xf32>
    %236 = vector.extract_strided_slice %235 {offsets = [0, 0], sizes = [2, 64], strides = [1, 1]} : vector<2x128xf32> to vector<2x64xf32>
    %237 = vector.extract_strided_slice %232 {offsets = [0, 0], sizes = [2, 64], strides = [1, 1]} : vector<2x128xf32> to vector<2x64xf32>
    %238 = arith.addf %236, %237 : vector<2x64xf32>
    %239 = arith.index_cast %231 : i32 to index
    %c0_64 = arith.constant 0 : index
    %c0_65 = arith.constant 0 : index
    %240 = vector.load %arg6[%239, %c0_64, %c0_65] : memref<8x2x128xf32, #tpu.memory_space<vmem>>, vector<1x2x128xf32>
    %241 = vector.shape_cast %240 : vector<1x2x128xf32> to vector<2x128xf32>
    %242 = vector.extract_strided_slice %241 {offsets = [0, 64], sizes = [2, 64], strides = [1, 1]} : vector<2x128xf32> to vector<2x64xf32>
    %243 = vector.extract_strided_slice %232 {offsets = [0, 64], sizes = [2, 64], strides = [1, 1]} : vector<2x128xf32> to vector<2x64xf32>
    %244 = arith.addf %242, %243 : vector<2x64xf32>
    %245 = vector.extract_strided_slice %238 {offsets = [0, 0], sizes = [2, 16], strides = [1, 1]} : vector<2x64xf32> to vector<2x16xf32>
    %246 = arith.negf %245 : vector<2x16xf32>
    %247 = math.exp %246 : vector<2x16xf32>
    %cst_66 = arith.constant 1.000000e+00 : f32
    %248 = vector.broadcast %cst_66 : f32 to vector<2x16xf32>
    %249 = arith.addf %248, %247 : vector<2x16xf32>
    %250 = arith.divf %248, %249 : vector<2x16xf32>
    %251 = vector.extract_strided_slice %238 {offsets = [0, 16], sizes = [2, 16], strides = [1, 1]} : vector<2x64xf32> to vector<2x16xf32>
    %252 = arith.negf %251 : vector<2x16xf32>
    %253 = math.exp %252 : vector<2x16xf32>
    %cst_67 = arith.constant 1.000000e+00 : f32
    %254 = vector.broadcast %cst_67 : f32 to vector<2x16xf32>
    %255 = arith.addf %254, %253 : vector<2x16xf32>
    %256 = arith.divf %254, %255 : vector<2x16xf32>
    %257 = vector.extract_strided_slice %238 {offsets = [0, 32], sizes = [2, 16], strides = [1, 1]} : vector<2x64xf32> to vector<2x16xf32>
    %258 = math.tanh %257 : vector<2x16xf32>
    %259 = vector.extract_strided_slice %238 {offsets = [0, 48], sizes = [2, 16], strides = [1, 1]} : vector<2x64xf32> to vector<2x16xf32>
    %260 = arith.negf %259 : vector<2x16xf32>
    %261 = math.exp %260 : vector<2x16xf32>
    %cst_68 = arith.constant 1.000000e+00 : f32
    %262 = vector.broadcast %cst_68 : f32 to vector<2x16xf32>
    %263 = arith.addf %262, %261 : vector<2x16xf32>
    %264 = arith.divf %262, %263 : vector<2x16xf32>
    %265 = arith.mulf %256, %194 : vector<2x16xf32>
    %266 = arith.mulf %250, %258 : vector<2x16xf32>
    %267 = arith.addf %265, %266 : vector<2x16xf32>
    %268 = math.tanh %267 : vector<2x16xf32>
    %269 = arith.mulf %264, %268 : vector<2x16xf32>
    %270 = vector.extract_strided_slice %244 {offsets = [0, 0], sizes = [2, 16], strides = [1, 1]} : vector<2x64xf32> to vector<2x16xf32>
    %271 = arith.negf %270 : vector<2x16xf32>
    %272 = math.exp %271 : vector<2x16xf32>
    %cst_69 = arith.constant 1.000000e+00 : f32
    %273 = vector.broadcast %cst_69 : f32 to vector<2x16xf32>
    %274 = arith.addf %273, %272 : vector<2x16xf32>
    %275 = arith.divf %273, %274 : vector<2x16xf32>
    %276 = vector.extract_strided_slice %244 {offsets = [0, 16], sizes = [2, 16], strides = [1, 1]} : vector<2x64xf32> to vector<2x16xf32>
    %277 = arith.negf %276 : vector<2x16xf32>
    %278 = math.exp %277 : vector<2x16xf32>
    %cst_70 = arith.constant 1.000000e+00 : f32
    %279 = vector.broadcast %cst_70 : f32 to vector<2x16xf32>
    %280 = arith.addf %279, %278 : vector<2x16xf32>
    %281 = arith.divf %279, %280 : vector<2x16xf32>
    %282 = vector.extract_strided_slice %244 {offsets = [0, 32], sizes = [2, 16], strides = [1, 1]} : vector<2x64xf32> to vector<2x16xf32>
    %283 = math.tanh %282 : vector<2x16xf32>
    %284 = vector.extract_strided_slice %244 {offsets = [0, 48], sizes = [2, 16], strides = [1, 1]} : vector<2x64xf32> to vector<2x16xf32>
    %285 = arith.negf %284 : vector<2x16xf32>
    %286 = math.exp %285 : vector<2x16xf32>
    %cst_71 = arith.constant 1.000000e+00 : f32
    %287 = vector.broadcast %cst_71 : f32 to vector<2x16xf32>
    %288 = arith.addf %287, %286 : vector<2x16xf32>
    %289 = arith.divf %287, %288 : vector<2x16xf32>
    %290 = arith.mulf %281, %219 : vector<2x16xf32>
    %291 = arith.mulf %275, %283 : vector<2x16xf32>
    %292 = arith.addf %290, %291 : vector<2x16xf32>
    %293 = math.tanh %292 : vector<2x16xf32>
    %294 = arith.mulf %289, %293 : vector<2x16xf32>
    %295 = arith.index_cast %c3_i32 : i32 to index
    %c0_72 = arith.constant 0 : index
    %c0_73 = arith.constant 0 : index
    %296 = vector.load %arg7[%295, %c0_72, %c0_73] : memref<8x2x16xf32, #tpu.memory_space<vmem>>, vector<1x2x16xf32>
    %297 = vector.shape_cast %296 : vector<1x2x16xf32> to vector<2x16xf32>
    %298 = vector.shape_cast %269 : vector<2x16xf32> to vector<1x2x16xf32>
    tpu.vector_store %arg7[%295, %c0_72, %c0_73], %298 {strides = array<i32>} : memref<8x2x16xf32, #tpu.memory_space<vmem>>, vector<1x2x16xf32>,
    %299 = arith.index_cast %231 : i32 to index
    %c0_74 = arith.constant 0 : index
    %c0_75 = arith.constant 0 : index
    %300 = vector.load %arg8[%299, %c0_74, %c0_75] : memref<8x2x16xf32, #tpu.memory_space<vmem>>, vector<1x2x16xf32>
    %301 = vector.shape_cast %300 : vector<1x2x16xf32> to vector<2x16xf32>
    %302 = vector.shape_cast %294 : vector<2x16xf32> to vector<1x2x16xf32>
    tpu.vector_store %arg8[%299, %c0_74, %c0_75], %302 {strides = array<i32>} : memref<8x2x16xf32, #tpu.memory_space<vmem>>, vector<1x2x16xf32>,
    %303 = tpu.concatenate %269, %294 in 1 : vector<2x16xf32>, vector<2x16xf32> -> vector<2x32xf32>
    %c4_i32 = arith.constant 4 : i32
    %c7_i32_76 = arith.constant 7 : i32
    %304 = arith.subi %c7_i32_76, %c4_i32 : i32
    %cst_77 = arith.constant dense<0.000000e+00> : vector<2x128xf32>
    %305 = tpu.matmul %303, %1, %cst_77 {dimension_numbers = #tpu.dot_dimension_numbers<[1], [0], [0], [1], [0, 0, 1, 1], [], []>} : vector<2x32xf32>, vector<32x128xf32>, vector<2x128xf32> -> vector<2x128xf32>
    %306 = arith.index_cast %c4_i32 : i32 to index
    %c0_78 = arith.constant 0 : index
    %c0_79 = arith.constant 0 : index
    %307 = vector.load %arg6[%306, %c0_78, %c0_79] : memref<8x2x128xf32, #tpu.memory_space<vmem>>, vector<1x2x128xf32>
    %308 = vector.shape_cast %307 : vector<1x2x128xf32> to vector<2x128xf32>
    %309 = vector.extract_strided_slice %308 {offsets = [0, 0], sizes = [2, 64], strides = [1, 1]} : vector<2x128xf32> to vector<2x64xf32>
    %310 = vector.extract_strided_slice %305 {offsets = [0, 0], sizes = [2, 64], strides = [1, 1]} : vector<2x128xf32> to vector<2x64xf32>
    %311 = arith.addf %309, %310 : vector<2x64xf32>
    %312 = arith.index_cast %304 : i32 to index
    %c0_80 = arith.constant 0 : index
    %c0_81 = arith.constant 0 : index
    %313 = vector.load %arg6[%312, %c0_80, %c0_81] : memref<8x2x128xf32, #tpu.memory_space<vmem>>, vector<1x2x128xf32>
    %314 = vector.shape_cast %313 : vector<1x2x128xf32> to vector<2x128xf32>
    %315 = vector.extract_strided_slice %314 {offsets = [0, 64], sizes = [2, 64], strides = [1, 1]} : vector<2x128xf32> to vector<2x64xf32>
    %316 = vector.extract_strided_slice %305 {offsets = [0, 64], sizes = [2, 64], strides = [1, 1]} : vector<2x128xf32> to vector<2x64xf32>
    %317 = arith.addf %315, %316 : vector<2x64xf32>
    %318 = vector.extract_strided_slice %311 {offsets = [0, 0], sizes = [2, 16], strides = [1, 1]} : vector<2x64xf32> to vector<2x16xf32>
    %319 = arith.negf %318 : vector<2x16xf32>
    %320 = math.exp %319 : vector<2x16xf32>
    %cst_82 = arith.constant 1.000000e+00 : f32
    %321 = vector.broadcast %cst_82 : f32 to vector<2x16xf32>
    %322 = arith.addf %321, %320 : vector<2x16xf32>
    %323 = arith.divf %321, %322 : vector<2x16xf32>
    %324 = vector.extract_strided_slice %311 {offsets = [0, 16], sizes = [2, 16], strides = [1, 1]} : vector<2x64xf32> to vector<2x16xf32>
    %325 = arith.negf %324 : vector<2x16xf32>
    %326 = math.exp %325 : vector<2x16xf32>
    %cst_83 = arith.constant 1.000000e+00 : f32
    %327 = vector.broadcast %cst_83 : f32 to vector<2x16xf32>
    %328 = arith.addf %327, %326 : vector<2x16xf32>
    %329 = arith.divf %327, %328 : vector<2x16xf32>
    %330 = vector.extract_strided_slice %311 {offsets = [0, 32], sizes = [2, 16], strides = [1, 1]} : vector<2x64xf32> to vector<2x16xf32>
    %331 = math.tanh %330 : vector<2x16xf32>
    %332 = vector.extract_strided_slice %311 {offsets = [0, 48], sizes = [2, 16], strides = [1, 1]} : vector<2x64xf32> to vector<2x16xf32>
    %333 = arith.negf %332 : vector<2x16xf32>
    %334 = math.exp %333 : vector<2x16xf32>
    %cst_84 = arith.constant 1.000000e+00 : f32
    %335 = vector.broadcast %cst_84 : f32 to vector<2x16xf32>
    %336 = arith.addf %335, %334 : vector<2x16xf32>
    %337 = arith.divf %335, %336 : vector<2x16xf32>
    %338 = arith.mulf %329, %267 : vector<2x16xf32>
    %339 = arith.mulf %323, %331 : vector<2x16xf32>
    %340 = arith.addf %338, %339 : vector<2x16xf32>
    %341 = math.tanh %340 : vector<2x16xf32>
    %342 = arith.mulf %337, %341 : vector<2x16xf32>
    %343 = vector.extract_strided_slice %317 {offsets = [0, 0], sizes = [2, 16], strides = [1, 1]} : vector<2x64xf32> to vector<2x16xf32>
    %344 = arith.negf %343 : vector<2x16xf32>
    %345 = math.exp %344 : vector<2x16xf32>
    %cst_85 = arith.constant 1.000000e+00 : f32
    %346 = vector.broadcast %cst_85 : f32 to vector<2x16xf32>
    %347 = arith.addf %346, %345 : vector<2x16xf32>
    %348 = arith.divf %346, %347 : vector<2x16xf32>
    %349 = vector.extract_strided_slice %317 {offsets = [0, 16], sizes = [2, 16], strides = [1, 1]} : vector<2x64xf32> to vector<2x16xf32>
    %350 = arith.negf %349 : vector<2x16xf32>
    %351 = math.exp %350 : vector<2x16xf32>
    %cst_86 = arith.constant 1.000000e+00 : f32
    %352 = vector.broadcast %cst_86 : f32 to vector<2x16xf32>
    %353 = arith.addf %352, %351 : vector<2x16xf32>
    %354 = arith.divf %352, %353 : vector<2x16xf32>
    %355 = vector.extract_strided_slice %317 {offsets = [0, 32], sizes = [2, 16], strides = [1, 1]} : vector<2x64xf32> to vector<2x16xf32>
    %356 = math.tanh %355 : vector<2x16xf32>
    %357 = vector.extract_strided_slice %317 {offsets = [0, 48], sizes = [2, 16], strides = [1, 1]} : vector<2x64xf32> to vector<2x16xf32>
    %358 = arith.negf %357 : vector<2x16xf32>
    %359 = math.exp %358 : vector<2x16xf32>
    %cst_87 = arith.constant 1.000000e+00 : f32
    %360 = vector.broadcast %cst_87 : f32 to vector<2x16xf32>
    %361 = arith.addf %360, %359 : vector<2x16xf32>
    %362 = arith.divf %360, %361 : vector<2x16xf32>
    %363 = arith.mulf %354, %292 : vector<2x16xf32>
    %364 = arith.mulf %348, %356 : vector<2x16xf32>
    %365 = arith.addf %363, %364 : vector<2x16xf32>
    %366 = math.tanh %365 : vector<2x16xf32>
    %367 = arith.mulf %362, %366 : vector<2x16xf32>
    %368 = arith.index_cast %c4_i32 : i32 to index
    %c0_88 = arith.constant 0 : index
    %c0_89 = arith.constant 0 : index
    %369 = vector.load %arg7[%368, %c0_88, %c0_89] : memref<8x2x16xf32, #tpu.memory_space<vmem>>, vector<1x2x16xf32>
    %370 = vector.shape_cast %369 : vector<1x2x16xf32> to vector<2x16xf32>
    %371 = vector.shape_cast %342 : vector<2x16xf32> to vector<1x2x16xf32>
    tpu.vector_store %arg7[%368, %c0_88, %c0_89], %371 {strides = array<i32>} : memref<8x2x16xf32, #tpu.memory_space<vmem>>, vector<1x2x16xf32>,
    %372 = arith.index_cast %304 : i32 to index
    %c0_90 = arith.constant 0 : index
    %c0_91 = arith.constant 0 : index
    %373 = vector.load %arg8[%372, %c0_90, %c0_91] : memref<8x2x16xf32, #tpu.memory_space<vmem>>, vector<1x2x16xf32>
    %374 = vector.shape_cast %373 : vector<1x2x16xf32> to vector<2x16xf32>
    %375 = vector.shape_cast %367 : vector<2x16xf32> to vector<1x2x16xf32>
    tpu.vector_store %arg8[%372, %c0_90, %c0_91], %375 {strides = array<i32>} : memref<8x2x16xf32, #tpu.memory_space<vmem>>, vector<1x2x16xf32>,
    %376 = tpu.concatenate %342, %367 in 1 : vector<2x16xf32>, vector<2x16xf32> -> vector<2x32xf32>
    %c5_i32 = arith.constant 5 : i32
    %c7_i32_92 = arith.constant 7 : i32
    %377 = arith.subi %c7_i32_92, %c5_i32 : i32
    %cst_93 = arith.constant dense<0.000000e+00> : vector<2x128xf32>
    %378 = tpu.matmul %376, %1, %cst_93 {dimension_numbers = #tpu.dot_dimension_numbers<[1], [0], [0], [1], [0, 0, 1, 1], [], []>} : vector<2x32xf32>, vector<32x128xf32>, vector<2x128xf32> -> vector<2x128xf32>
    %379 = arith.index_cast %c5_i32 : i32 to index
    %c0_94 = arith.constant 0 : index
    %c0_95 = arith.constant 0 : index
    %380 = vector.load %arg6[%379, %c0_94, %c0_95] : memref<8x2x128xf32, #tpu.memory_space<vmem>>, vector<1x2x128xf32>
    %381 = vector.shape_cast %380 : vector<1x2x128xf32> to vector<2x128xf32>
    %382 = vector.extract_strided_slice %381 {offsets = [0, 0], sizes = [2, 64], strides = [1, 1]} : vector<2x128xf32> to vector<2x64xf32>
    %383 = vector.extract_strided_slice %378 {offsets = [0, 0], sizes = [2, 64], strides = [1, 1]} : vector<2x128xf32> to vector<2x64xf32>
    %384 = arith.addf %382, %383 : vector<2x64xf32>
    %385 = arith.index_cast %377 : i32 to index
    %c0_96 = arith.constant 0 : index
    %c0_97 = arith.constant 0 : index
    %386 = vector.load %arg6[%385, %c0_96, %c0_97] : memref<8x2x128xf32, #tpu.memory_space<vmem>>, vector<1x2x128xf32>
    %387 = vector.shape_cast %386 : vector<1x2x128xf32> to vector<2x128xf32>
    %388 = vector.extract_strided_slice %387 {offsets = [0, 64], sizes = [2, 64], strides = [1, 1]} : vector<2x128xf32> to vector<2x64xf32>
    %389 = vector.extract_strided_slice %378 {offsets = [0, 64], sizes = [2, 64], strides = [1, 1]} : vector<2x128xf32> to vector<2x64xf32>
    %390 = arith.addf %388, %389 : vector<2x64xf32>
    %391 = vector.extract_strided_slice %384 {offsets = [0, 0], sizes = [2, 16], strides = [1, 1]} : vector<2x64xf32> to vector<2x16xf32>
    %392 = arith.negf %391 : vector<2x16xf32>
    %393 = math.exp %392 : vector<2x16xf32>
    %cst_98 = arith.constant 1.000000e+00 : f32
    %394 = vector.broadcast %cst_98 : f32 to vector<2x16xf32>
    %395 = arith.addf %394, %393 : vector<2x16xf32>
    %396 = arith.divf %394, %395 : vector<2x16xf32>
    %397 = vector.extract_strided_slice %384 {offsets = [0, 16], sizes = [2, 16], strides = [1, 1]} : vector<2x64xf32> to vector<2x16xf32>
    %398 = arith.negf %397 : vector<2x16xf32>
    %399 = math.exp %398 : vector<2x16xf32>
    %cst_99 = arith.constant 1.000000e+00 : f32
    %400 = vector.broadcast %cst_99 : f32 to vector<2x16xf32>
    %401 = arith.addf %400, %399 : vector<2x16xf32>
    %402 = arith.divf %400, %401 : vector<2x16xf32>
    %403 = vector.extract_strided_slice %384 {offsets = [0, 32], sizes = [2, 16], strides = [1, 1]} : vector<2x64xf32> to vector<2x16xf32>
    %404 = math.tanh %403 : vector<2x16xf32>
    %405 = vector.extract_strided_slice %384 {offsets = [0, 48], sizes = [2, 16], strides = [1, 1]} : vector<2x64xf32> to vector<2x16xf32>
    %406 = arith.negf %405 : vector<2x16xf32>
    %407 = math.exp %406 : vector<2x16xf32>
    %cst_100 = arith.constant 1.000000e+00 : f32
    %408 = vector.broadcast %cst_100 : f32 to vector<2x16xf32>
    %409 = arith.addf %408, %407 : vector<2x16xf32>
    %410 = arith.divf %408, %409 : vector<2x16xf32>
    %411 = arith.mulf %402, %340 : vector<2x16xf32>
    %412 = arith.mulf %396, %404 : vector<2x16xf32>
    %413 = arith.addf %411, %412 : vector<2x16xf32>
    %414 = math.tanh %413 : vector<2x16xf32>
    %415 = arith.mulf %410, %414 : vector<2x16xf32>
    %416 = vector.extract_strided_slice %390 {offsets = [0, 0], sizes = [2, 16], strides = [1, 1]} : vector<2x64xf32> to vector<2x16xf32>
    %417 = arith.negf %416 : vector<2x16xf32>
    %418 = math.exp %417 : vector<2x16xf32>
    %cst_101 = arith.constant 1.000000e+00 : f32
    %419 = vector.broadcast %cst_101 : f32 to vector<2x16xf32>
    %420 = arith.addf %419, %418 : vector<2x16xf32>
    %421 = arith.divf %419, %420 : vector<2x16xf32>
    %422 = vector.extract_strided_slice %390 {offsets = [0, 16], sizes = [2, 16], strides = [1, 1]} : vector<2x64xf32> to vector<2x16xf32>
    %423 = arith.negf %422 : vector<2x16xf32>
    %424 = math.exp %423 : vector<2x16xf32>
    %cst_102 = arith.constant 1.000000e+00 : f32
    %425 = vector.broadcast %cst_102 : f32 to vector<2x16xf32>
    %426 = arith.addf %425, %424 : vector<2x16xf32>
    %427 = arith.divf %425, %426 : vector<2x16xf32>
    %428 = vector.extract_strided_slice %390 {offsets = [0, 32], sizes = [2, 16], strides = [1, 1]} : vector<2x64xf32> to vector<2x16xf32>
    %429 = math.tanh %428 : vector<2x16xf32>
    %430 = vector.extract_strided_slice %390 {offsets = [0, 48], sizes = [2, 16], strides = [1, 1]} : vector<2x64xf32> to vector<2x16xf32>
    %431 = arith.negf %430 : vector<2x16xf32>
    %432 = math.exp %431 : vector<2x16xf32>
    %cst_103 = arith.constant 1.000000e+00 : f32
    %433 = vector.broadcast %cst_103 : f32 to vector<2x16xf32>
    %434 = arith.addf %433, %432 : vector<2x16xf32>
    %435 = arith.divf %433, %434 : vector<2x16xf32>
    %436 = arith.mulf %427, %365 : vector<2x16xf32>
    %437 = arith.mulf %421, %429 : vector<2x16xf32>
    %438 = arith.addf %436, %437 : vector<2x16xf32>
    %439 = math.tanh %438 : vector<2x16xf32>
    %440 = arith.mulf %435, %439 : vector<2x16xf32>
    %441 = arith.index_cast %c5_i32 : i32 to index
    %c0_104 = arith.constant 0 : index
    %c0_105 = arith.constant 0 : index
    %442 = vector.load %arg7[%441, %c0_104, %c0_105] : memref<8x2x16xf32, #tpu.memory_space<vmem>>, vector<1x2x16xf32>
    %443 = vector.shape_cast %442 : vector<1x2x16xf32> to vector<2x16xf32>
    %444 = vector.shape_cast %415 : vector<2x16xf32> to vector<1x2x16xf32>
    tpu.vector_store %arg7[%441, %c0_104, %c0_105], %444 {strides = array<i32>} : memref<8x2x16xf32, #tpu.memory_space<vmem>>, vector<1x2x16xf32>,
    %445 = arith.index_cast %377 : i32 to index
    %c0_106 = arith.constant 0 : index
    %c0_107 = arith.constant 0 : index
    %446 = vector.load %arg8[%445, %c0_106, %c0_107] : memref<8x2x16xf32, #tpu.memory_space<vmem>>, vector<1x2x16xf32>
    %447 = vector.shape_cast %446 : vector<1x2x16xf32> to vector<2x16xf32>
    %448 = vector.shape_cast %440 : vector<2x16xf32> to vector<1x2x16xf32>
    tpu.vector_store %arg8[%445, %c0_106, %c0_107], %448 {strides = array<i32>} : memref<8x2x16xf32, #tpu.memory_space<vmem>>, vector<1x2x16xf32>,
    %449 = tpu.concatenate %415, %440 in 1 : vector<2x16xf32>, vector<2x16xf32> -> vector<2x32xf32>
    %c6_i32 = arith.constant 6 : i32
    %c7_i32_108 = arith.constant 7 : i32
    %450 = arith.subi %c7_i32_108, %c6_i32 : i32
    %cst_109 = arith.constant dense<0.000000e+00> : vector<2x128xf32>
    %451 = tpu.matmul %449, %1, %cst_109 {dimension_numbers = #tpu.dot_dimension_numbers<[1], [0], [0], [1], [0, 0, 1, 1], [], []>} : vector<2x32xf32>, vector<32x128xf32>, vector<2x128xf32> -> vector<2x128xf32>
    %452 = arith.index_cast %c6_i32 : i32 to index
    %c0_110 = arith.constant 0 : index
    %c0_111 = arith.constant 0 : index
    %453 = vector.load %arg6[%452, %c0_110, %c0_111] : memref<8x2x128xf32, #tpu.memory_space<vmem>>, vector<1x2x128xf32>
    %454 = vector.shape_cast %453 : vector<1x2x128xf32> to vector<2x128xf32>
    %455 = vector.extract_strided_slice %454 {offsets = [0, 0], sizes = [2, 64], strides = [1, 1]} : vector<2x128xf32> to vector<2x64xf32>
    %456 = vector.extract_strided_slice %451 {offsets = [0, 0], sizes = [2, 64], strides = [1, 1]} : vector<2x128xf32> to vector<2x64xf32>
    %457 = arith.addf %455, %456 : vector<2x64xf32>
    %458 = arith.index_cast %450 : i32 to index
    %c0_112 = arith.constant 0 : index
    %c0_113 = arith.constant 0 : index
    %459 = vector.load %arg6[%458, %c0_112, %c0_113] : memref<8x2x128xf32, #tpu.memory_space<vmem>>, vector<1x2x128xf32>
    %460 = vector.shape_cast %459 : vector<1x2x128xf32> to vector<2x128xf32>
    %461 = vector.extract_strided_slice %460 {offsets = [0, 64], sizes = [2, 64], strides = [1, 1]} : vector<2x128xf32> to vector<2x64xf32>
    %462 = vector.extract_strided_slice %451 {offsets = [0, 64], sizes = [2, 64], strides = [1, 1]} : vector<2x128xf32> to vector<2x64xf32>
    %463 = arith.addf %461, %462 : vector<2x64xf32>
    %464 = vector.extract_strided_slice %457 {offsets = [0, 0], sizes = [2, 16], strides = [1, 1]} : vector<2x64xf32> to vector<2x16xf32>
    %465 = arith.negf %464 : vector<2x16xf32>
    %466 = math.exp %465 : vector<2x16xf32>
    %cst_114 = arith.constant 1.000000e+00 : f32
    %467 = vector.broadcast %cst_114 : f32 to vector<2x16xf32>
    %468 = arith.addf %467, %466 : vector<2x16xf32>
    %469 = arith.divf %467, %468 : vector<2x16xf32>
    %470 = vector.extract_strided_slice %457 {offsets = [0, 16], sizes = [2, 16], strides = [1, 1]} : vector<2x64xf32> to vector<2x16xf32>
    %471 = arith.negf %470 : vector<2x16xf32>
    %472 = math.exp %471 : vector<2x16xf32>
    %cst_115 = arith.constant 1.000000e+00 : f32
    %473 = vector.broadcast %cst_115 : f32 to vector<2x16xf32>
    %474 = arith.addf %473, %472 : vector<2x16xf32>
    %475 = arith.divf %473, %474 : vector<2x16xf32>
    %476 = vector.extract_strided_slice %457 {offsets = [0, 32], sizes = [2, 16], strides = [1, 1]} : vector<2x64xf32> to vector<2x16xf32>
    %477 = math.tanh %476 : vector<2x16xf32>
    %478 = vector.extract_strided_slice %457 {offsets = [0, 48], sizes = [2, 16], strides = [1, 1]} : vector<2x64xf32> to vector<2x16xf32>
    %479 = arith.negf %478 : vector<2x16xf32>
    %480 = math.exp %479 : vector<2x16xf32>
    %cst_116 = arith.constant 1.000000e+00 : f32
    %481 = vector.broadcast %cst_116 : f32 to vector<2x16xf32>
    %482 = arith.addf %481, %480 : vector<2x16xf32>
    %483 = arith.divf %481, %482 : vector<2x16xf32>
    %484 = arith.mulf %475, %413 : vector<2x16xf32>
    %485 = arith.mulf %469, %477 : vector<2x16xf32>
    %486 = arith.addf %484, %485 : vector<2x16xf32>
    %487 = math.tanh %486 : vector<2x16xf32>
    %488 = arith.mulf %483, %487 : vector<2x16xf32>
    %489 = vector.extract_strided_slice %463 {offsets = [0, 0], sizes = [2, 16], strides = [1, 1]} : vector<2x64xf32> to vector<2x16xf32>
    %490 = arith.negf %489 : vector<2x16xf32>
    %491 = math.exp %490 : vector<2x16xf32>
    %cst_117 = arith.constant 1.000000e+00 : f32
    %492 = vector.broadcast %cst_117 : f32 to vector<2x16xf32>
    %493 = arith.addf %492, %491 : vector<2x16xf32>
    %494 = arith.divf %492, %493 : vector<2x16xf32>
    %495 = vector.extract_strided_slice %463 {offsets = [0, 16], sizes = [2, 16], strides = [1, 1]} : vector<2x64xf32> to vector<2x16xf32>
    %496 = arith.negf %495 : vector<2x16xf32>
    %497 = math.exp %496 : vector<2x16xf32>
    %cst_118 = arith.constant 1.000000e+00 : f32
    %498 = vector.broadcast %cst_118 : f32 to vector<2x16xf32>
    %499 = arith.addf %498, %497 : vector<2x16xf32>
    %500 = arith.divf %498, %499 : vector<2x16xf32>
    %501 = vector.extract_strided_slice %463 {offsets = [0, 32], sizes = [2, 16], strides = [1, 1]} : vector<2x64xf32> to vector<2x16xf32>
    %502 = math.tanh %501 : vector<2x16xf32>
    %503 = vector.extract_strided_slice %463 {offsets = [0, 48], sizes = [2, 16], strides = [1, 1]} : vector<2x64xf32> to vector<2x16xf32>
    %504 = arith.negf %503 : vector<2x16xf32>
    %505 = math.exp %504 : vector<2x16xf32>
    %cst_119 = arith.constant 1.000000e+00 : f32
    %506 = vector.broadcast %cst_119 : f32 to vector<2x16xf32>
    %507 = arith.addf %506, %505 : vector<2x16xf32>
    %508 = arith.divf %506, %507 : vector<2x16xf32>
    %509 = arith.mulf %500, %438 : vector<2x16xf32>
    %510 = arith.mulf %494, %502 : vector<2x16xf32>
    %511 = arith.addf %509, %510 : vector<2x16xf32>
    %512 = math.tanh %511 : vector<2x16xf32>
    %513 = arith.mulf %508, %512 : vector<2x16xf32>
    %514 = arith.index_cast %c6_i32 : i32 to index
    %c0_120 = arith.constant 0 : index
    %c0_121 = arith.constant 0 : index
    %515 = vector.load %arg7[%514, %c0_120, %c0_121] : memref<8x2x16xf32, #tpu.memory_space<vmem>>, vector<1x2x16xf32>
    %516 = vector.shape_cast %515 : vector<1x2x16xf32> to vector<2x16xf32>
    %517 = vector.shape_cast %488 : vector<2x16xf32> to vector<1x2x16xf32>
    tpu.vector_store %arg7[%514, %c0_120, %c0_121], %517 {strides = array<i32>} : memref<8x2x16xf32, #tpu.memory_space<vmem>>, vector<1x2x16xf32>,
    %518 = arith.index_cast %450 : i32 to index
    %c0_122 = arith.constant 0 : index
    %c0_123 = arith.constant 0 : index
    %519 = vector.load %arg8[%518, %c0_122, %c0_123] : memref<8x2x16xf32, #tpu.memory_space<vmem>>, vector<1x2x16xf32>
    %520 = vector.shape_cast %519 : vector<1x2x16xf32> to vector<2x16xf32>
    %521 = vector.shape_cast %513 : vector<2x16xf32> to vector<1x2x16xf32>
    tpu.vector_store %arg8[%518, %c0_122, %c0_123], %521 {strides = array<i32>} : memref<8x2x16xf32, #tpu.memory_space<vmem>>, vector<1x2x16xf32>,
    %522 = tpu.concatenate %488, %513 in 1 : vector<2x16xf32>, vector<2x16xf32> -> vector<2x32xf32>
    %c7_i32_124 = arith.constant 7 : i32
    %c7_i32_125 = arith.constant 7 : i32
    %523 = arith.subi %c7_i32_125, %c7_i32_124 : i32
    %cst_126 = arith.constant dense<0.000000e+00> : vector<2x128xf32>
    %524 = tpu.matmul %522, %1, %cst_126 {dimension_numbers = #tpu.dot_dimension_numbers<[1], [0], [0], [1], [0, 0, 1, 1], [], []>} : vector<2x32xf32>, vector<32x128xf32>, vector<2x128xf32> -> vector<2x128xf32>
    %525 = arith.index_cast %c7_i32_124 : i32 to index
    %c0_127 = arith.constant 0 : index
    %c0_128 = arith.constant 0 : index
    %526 = vector.load %arg6[%525, %c0_127, %c0_128] : memref<8x2x128xf32, #tpu.memory_space<vmem>>, vector<1x2x128xf32>
    %527 = vector.shape_cast %526 : vector<1x2x128xf32> to vector<2x128xf32>
    %528 = vector.extract_strided_slice %527 {offsets = [0, 0], sizes = [2, 64], strides = [1, 1]} : vector<2x128xf32> to vector<2x64xf32>
    %529 = vector.extract_strided_slice %524 {offsets = [0, 0], sizes = [2, 64], strides = [1, 1]} : vector<2x128xf32> to vector<2x64xf32>
    %530 = arith.addf %528, %529 : vector<2x64xf32>
    %531 = arith.index_cast %523 : i32 to index
    %c0_129 = arith.constant 0 : index
    %c0_130 = arith.constant 0 : index
    %532 = vector.load %arg6[%531, %c0_129, %c0_130] : memref<8x2x128xf32, #tpu.memory_space<vmem>>, vector<1x2x128xf32>
    %533 = vector.shape_cast %532 : vector<1x2x128xf32> to vector<2x128xf32>
    %534 = vector.extract_strided_slice %533 {offsets = [0, 64], sizes = [2, 64], strides = [1, 1]} : vector<2x128xf32> to vector<2x64xf32>
    %535 = vector.extract_strided_slice %524 {offsets = [0, 64], sizes = [2, 64], strides = [1, 1]} : vector<2x128xf32> to vector<2x64xf32>
    %536 = arith.addf %534, %535 : vector<2x64xf32>
    %537 = vector.extract_strided_slice %530 {offsets = [0, 0], sizes = [2, 16], strides = [1, 1]} : vector<2x64xf32> to vector<2x16xf32>
    %538 = arith.negf %537 : vector<2x16xf32>
    %539 = math.exp %538 : vector<2x16xf32>
    %cst_131 = arith.constant 1.000000e+00 : f32
    %540 = vector.broadcast %cst_131 : f32 to vector<2x16xf32>
    %541 = arith.addf %540, %539 : vector<2x16xf32>
    %542 = arith.divf %540, %541 : vector<2x16xf32>
    %543 = vector.extract_strided_slice %530 {offsets = [0, 16], sizes = [2, 16], strides = [1, 1]} : vector<2x64xf32> to vector<2x16xf32>
    %544 = arith.negf %543 : vector<2x16xf32>
    %545 = math.exp %544 : vector<2x16xf32>
    %cst_132 = arith.constant 1.000000e+00 : f32
    %546 = vector.broadcast %cst_132 : f32 to vector<2x16xf32>
    %547 = arith.addf %546, %545 : vector<2x16xf32>
    %548 = arith.divf %546, %547 : vector<2x16xf32>
    %549 = vector.extract_strided_slice %530 {offsets = [0, 32], sizes = [2, 16], strides = [1, 1]} : vector<2x64xf32> to vector<2x16xf32>
    %550 = math.tanh %549 : vector<2x16xf32>
    %551 = vector.extract_strided_slice %530 {offsets = [0, 48], sizes = [2, 16], strides = [1, 1]} : vector<2x64xf32> to vector<2x16xf32>
    %552 = arith.negf %551 : vector<2x16xf32>
    %553 = math.exp %552 : vector<2x16xf32>
    %cst_133 = arith.constant 1.000000e+00 : f32
    %554 = vector.broadcast %cst_133 : f32 to vector<2x16xf32>
    %555 = arith.addf %554, %553 : vector<2x16xf32>
    %556 = arith.divf %554, %555 : vector<2x16xf32>
    %557 = arith.mulf %548, %486 : vector<2x16xf32>
    %558 = arith.mulf %542, %550 : vector<2x16xf32>
    %559 = arith.addf %557, %558 : vector<2x16xf32>
    %560 = math.tanh %559 : vector<2x16xf32>
    %561 = arith.mulf %556, %560 : vector<2x16xf32>
    %562 = vector.extract_strided_slice %536 {offsets = [0, 0], sizes = [2, 16], strides = [1, 1]} : vector<2x64xf32> to vector<2x16xf32>
    %563 = arith.negf %562 : vector<2x16xf32>
    %564 = math.exp %563 : vector<2x16xf32>
    %cst_134 = arith.constant 1.000000e+00 : f32
    %565 = vector.broadcast %cst_134 : f32 to vector<2x16xf32>
    %566 = arith.addf %565, %564 : vector<2x16xf32>
    %567 = arith.divf %565, %566 : vector<2x16xf32>
    %568 = vector.extract_strided_slice %536 {offsets = [0, 16], sizes = [2, 16], strides = [1, 1]} : vector<2x64xf32> to vector<2x16xf32>
    %569 = arith.negf %568 : vector<2x16xf32>
    %570 = math.exp %569 : vector<2x16xf32>
    %cst_135 = arith.constant 1.000000e+00 : f32
    %571 = vector.broadcast %cst_135 : f32 to vector<2x16xf32>
    %572 = arith.addf %571, %570 : vector<2x16xf32>
    %573 = arith.divf %571, %572 : vector<2x16xf32>
    %574 = vector.extract_strided_slice %536 {offsets = [0, 32], sizes = [2, 16], strides = [1, 1]} : vector<2x64xf32> to vector<2x16xf32>
    %575 = math.tanh %574 : vector<2x16xf32>
    %576 = vector.extract_strided_slice %536 {offsets = [0, 48], sizes = [2, 16], strides = [1, 1]} : vector<2x64xf32> to vector<2x16xf32>
    %577 = arith.negf %576 : vector<2x16xf32>
    %578 = math.exp %577 : vector<2x16xf32>
    %cst_136 = arith.constant 1.000000e+00 : f32
    %579 = vector.broadcast %cst_136 : f32 to vector<2x16xf32>
    %580 = arith.addf %579, %578 : vector<2x16xf32>
    %581 = arith.divf %579, %580 : vector<2x16xf32>
    %582 = arith.mulf %573, %511 : vector<2x16xf32>
    %583 = arith.mulf %567, %575 : vector<2x16xf32>
    %584 = arith.addf %582, %583 : vector<2x16xf32>
    %585 = math.tanh %584 : vector<2x16xf32>
    %586 = arith.mulf %581, %585 : vector<2x16xf32>
    %587 = arith.index_cast %c7_i32_124 : i32 to index
    %c0_137 = arith.constant 0 : index
    %c0_138 = arith.constant 0 : index
    %588 = vector.load %arg7[%587, %c0_137, %c0_138] : memref<8x2x16xf32, #tpu.memory_space<vmem>>, vector<1x2x16xf32>
    %589 = vector.shape_cast %588 : vector<1x2x16xf32> to vector<2x16xf32>
    %590 = vector.shape_cast %561 : vector<2x16xf32> to vector<1x2x16xf32>
    tpu.vector_store %arg7[%587, %c0_137, %c0_138], %590 {strides = array<i32>} : memref<8x2x16xf32, #tpu.memory_space<vmem>>, vector<1x2x16xf32>,
    %591 = arith.index_cast %523 : i32 to index
    %c0_139 = arith.constant 0 : index
    %c0_140 = arith.constant 0 : index
    %592 = vector.load %arg8[%591, %c0_139, %c0_140] : memref<8x2x16xf32, #tpu.memory_space<vmem>>, vector<1x2x16xf32>
    %593 = vector.shape_cast %592 : vector<1x2x16xf32> to vector<2x16xf32>
    %594 = vector.shape_cast %586 : vector<2x16xf32> to vector<1x2x16xf32>
    tpu.vector_store %arg8[%591, %c0_139, %c0_140], %594 {strides = array<i32>} : memref<8x2x16xf32, #tpu.memory_space<vmem>>, vector<1x2x16xf32>,
    %595 = tpu.concatenate %561, %586 in 1 : vector<2x16xf32>, vector<2x16xf32> -> vector<2x32xf32>
    %c8_i32 = arith.constant 8 : i32
    %c0_141 = arith.constant 0 : index
    %c0_142 = arith.constant 0 : index
    %c0_143 = arith.constant 0 : index
    %596 = vector.load %arg7[%c0_141, %c0_142, %c0_143] : memref<8x2x16xf32, #tpu.memory_space<vmem>>, vector<8x2x16xf32>
    %c0_144 = arith.constant 0 : index
    %c0_145 = arith.constant 0 : index
    %c0_146 = arith.constant 0 : index
    %597 = vector.load %arg8[%c0_144, %c0_145, %c0_146] : memref<8x2x16xf32, #tpu.memory_space<vmem>>, vector<8x2x16xf32>
    %598 = tpu.concatenate %596, %597 in 2 : vector<8x2x16xf32>, vector<8x2x16xf32> -> vector<8x2x32xf32>
    %c0_147 = arith.constant 0 : index
    %c0_148 = arith.constant 0 : index
    %c0_149 = arith.constant 0 : index
    %599 = vector.load %arg5[%c0_147, %c0_148, %c0_149] : memref<8x2x32xf32, #tpu.memory_space<vmem>>, vector<8x2x32xf32>
    tpu.vector_store %arg5[%c0_147, %c0_148, %c0_149], %598 {strides = array<i32>} : memref<8x2x32xf32, #tpu.memory_space<vmem>>, vector<8x2x32xf32>,
    return
  }
  func.func @transform_0(%arg0: i32) -> (i32, i32, i32) {
    %c0_i32 = arith.constant 0 : i32
    %c0_i32_0 = arith.constant 0 : i32
    %c0_i32_1 = arith.constant 0 : i32
    return %c0_i32, %arg0, %c0_i32_0 : i32, i32, i32
  }
  func.func @transform_1(%arg0: i32) -> (i32, i32) {
    %c0_i32 = arith.constant 0 : i32
    %c0_i32_0 = arith.constant 0 : i32
    %c0_i32_1 = arith.constant 0 : i32
    return %c0_i32, %c0_i32_0 : i32, i32
  }
  func.func @transform_2(%arg0: i32) -> (i32, i32) {
    %c0_i32 = arith.constant 0 : i32
    %c0_i32_0 = arith.constant 0 : i32
    %c0_i32_1 = arith.constant 0 : i32
    return %c0_i32, %c0_i32_0 : i32, i32
  }
  func.func @transform_3(%arg0: i32) -> (i32, i32) {
    %c0_i32 = arith.constant 0 : i32
    %c0_i32_0 = arith.constant 0 : i32
    %c0_i32_1 = arith.constant 0 : i32
    return %c0_i32, %c0_i32_0 : i32, i32
  }
  func.func @transform_4(%arg0: i32) -> (i32, i32, i32) {
    %c0_i32 = arith.constant 0 : i32
    %c0_i32_0 = arith.constant 0 : i32
    %c0_i32_1 = arith.constant 0 : i32
    return %c0_i32, %arg0, %c0_i32_0 : i32, i32, i32
  }
}

</mosaic_0001>

<llo_original>
// kernel: tpu_custom_call.1
$region0: #{tpu_custom_call.1}
  #allocation0 [shape = 'u32[]', space=smem, size = 0x4, offset = 0x4, fixed_abs, tag = 'smem constant byte address 0x4 - core index']
  #allocation1 [shape = 'u32[144,128]{1,0:T(1,128)}', space=vmem, size = 0x12000, scoped, tag = 'internal scratch']
  #allocation2 [shape = 'f32[8,2,128]{2,1,0:T(2,128)}', space=vmem, size = 0x2000, scoped, tag = 'scratch operand']
  #allocation3 [shape = 'f32[8,2,16]{2,1,0:T(2,128)}', space=vmem, size = 0x2000, scoped, tag = 'scratch operand']
  #allocation4 [shape = 'f32[8,2,16]{2,1,0:T(2,128)}', space=vmem, size = 0x2000, scoped, tag = 'scratch operand']
  %s0 = inlined_call_operand.hbm [shape: f32[8,2,16], index: 0, kind: input, shape index: {}]
  %s1 = inlined_call_operand.hbm [shape: f32[16,128], index: 1, kind: input, shape index: {}]
  %s2 = inlined_call_operand.hbm [shape: f32[32,128], index: 2, kind: input, shape index: {}]
  %s3 = inlined_call_operand.vmem [shape: f32[1,128], index: 3, kind: input, shape index: {}]
  %s4 = inlined_call_operand.hbm [shape: f32[8,2,32], index: 4, kind: output, shape index: {}]
  %s5 = sld [smem:[#allocation0]]
  $region38: #{tpu_custom_call.1} parent=0
    _
  %s7 = ssub.s32 1, %s5
  %s8 = scalar_select 0, %s7, %s5
  $region1: #{tpu_custom_call.1} parent=0
    #allocation5 [shape = 'u8[8192]{0}', space=vmem, size = 0x2000, scoped, tag = 'input window, operand 0, single buffered']
    #allocation6 [shape = 's32[1]{0}', space=sflag, size = 0x4, scoped, tag = 'scoped memory for tpu_custom_call.1']
    #allocation7 [shape = 's32[1]{0}', space=sflag, size = 0x4, scoped, tag = 'scoped memory for tpu_custom_call.1']
    #allocation8 [shape = 'u8[8192]{0}', space=vmem, size = 0x2000, scoped, tag = 'input window, operand 1, single buffered']
    #allocation9 [shape = 's32[1]{0}', space=sflag, size = 0x4, scoped, tag = 'scoped memory for tpu_custom_call.1']
    #allocation10 [shape = 'u8[16384]{0}', space=vmem, size = 0x4000, scoped, tag = 'input window, operand 2, single buffered']
    #allocation11 [shape = 'u8[8192]{0}', space=vmem, size = 0x2000, scoped, tag = 'output window, operand 0, single buffered']
    %9 = vsyncpa [#allocation6], 0
    %10 = vsyncpa [#allocation9], 0
    %11 = vsyncpa [#allocation7], 0
    // Predicated region
    $region2: #{tpu_custom_call.1} parent=1 // pred_check
      _
    $region3: #{tpu_custom_call.1} parent=1 // pred_check_branch
      %13 = sbr.rel (0) target = $region5
    $region4: #{tpu_custom_call.1} parent=1 // pred_region
      %s15 = ssub.s32 256, 256
      %16 = vsyncadd [#allocation6], %s15
      %s17 = sshll.u32 [#allocation5], 4
      %s18 = int_to_ptr.vmem [resolvable:$true] %s17
      %23 = dma.hbm_to_vmem [thread:$0]  %s0, 256, %s18, [#allocation6], 32, 32, 2
    $region5: #{tpu_custom_call.1} parent=1 // pred_fallthru
      _
    // Predicated region
    $region6: #{tpu_custom_call.1} parent=1 // pred_check
      _
    $region7: #{tpu_custom_call.1} parent=1 // pred_check_branch
      %25 = sbr.rel (0) target = $region9
    $region8: #{tpu_custom_call.1} parent=1 // pred_region
      %s27 = ssub.s32 256, 256
      %28 = vsyncadd [#allocation9], %s27
      %s29 = sshll.u32 [#allocation8], 4
      %s30 = int_to_ptr.vmem [resolvable:$true] %s29
      %35 = dma.hbm_to_vmem [thread:$0]  %s1, 256, %s30, [#allocation9], 128, 128, 8
    $region9: #{tpu_custom_call.1} parent=1 // pred_fallthru
      _
    // Predicated region
    $region10: #{tpu_custom_call.1} parent=1 // pred_check
      _
    $region11: #{tpu_custom_call.1} parent=1 // pred_check_branch
      %37 = sbr.rel (0) target = $region13
    $region12: #{tpu_custom_call.1} parent=1 // pred_region
      %s39 = ssub.s32 512, 512
      %40 = vsyncadd [#allocation9], %s39
      %s41 = sshll.u32 [#allocation10], 4
      %s42 = int_to_ptr.vmem [resolvable:$true] %s41
      %47 = dma.hbm_to_vmem [thread:$0]  %s2, 512, %s42, [#allocation9], 128, 128, 8
    $region13: #{tpu_custom_call.1} parent=1 // pred_fallthru
      _
    // Predicated region
    $region14: #{tpu_custom_call.1} parent=1 // pred_check
      _
    $region15: #{tpu_custom_call.1} parent=1 // pred_check_branch
      %49 = sbr.rel (0) target = $region17
    $region16: #{tpu_custom_call.1} parent=1 // pred_region
      _
    $region17: #{tpu_custom_call.1} parent=1 // pred_fallthru
      _
    // Predicated region
    $region18: #{tpu_custom_call.1} parent=1 // pred_check
      _
    $region19: #{tpu_custom_call.1} parent=1 // pred_check_branch
      %51 = sbr.rel (0) target = $region21
    $region20: #{tpu_custom_call.1} parent=1 // pred_region
      %52 = dma.done [#allocation6], 256
    $region21: #{tpu_custom_call.1} parent=1 // pred_fallthru
      _
    // Predicated region
    $region22: #{tpu_custom_call.1} parent=1 // pred_check
      _
    $region23: #{tpu_custom_call.1} parent=1 // pred_check_branch
      %54 = sbr.rel (0) target = $region25
    $region24: #{tpu_custom_call.1} parent=1 // pred_region
      %55 = dma.done [#allocation9], 256
    $region25: #{tpu_custom_call.1} parent=1 // pred_fallthru
      _
    // Predicated region
    $region26: #{tpu_custom_call.1} parent=1 // pred_check
      _
    $region27: #{tpu_custom_call.1} parent=1 // pred_check_branch
      %57 = sbr.rel (0) target = $region29
    $region28: #{tpu_custom_call.1} parent=1 // pred_region
      %58 = dma.done [#allocation9], 512
    $region29: #{tpu_custom_call.1} parent=1 // pred_fallthru
      _
    %v59 = vld [vmem:[#allocation8] sm:$0xff]
    %v60 = vld [vmem:[#allocation8 + $0x8] sm:$0xff]
    %v61 = vld [vmem:[#allocation10] sm:$0xff]
    %v62 = vld [vmem:[#allocation10 + $0x8] sm:$0xff]
    %v63 = vld [vmem:[#allocation10 + $0x10] sm:$0xff]
    %v64 = vld [vmem:[#allocation10 + $0x18] sm:$0xff]
    %v65 = vld [vmem:[%s3] sm:$0x1]
    %v66 = vld [vmem:[#allocation5] sm:$0x3]
    %v67 = vld [vmem:[#allocation5 + $0x2] sm:$0x3]
    %v68 = vld [vmem:[#allocation5 + $0x4] sm:$0x3]
    %v69 = vld [vmem:[#allocation5 + $0x6] sm:$0x3]
    %v70 = vld [vmem:[#allocation5 + $0x8] sm:$0x3]
    %v71 = vld [vmem:[#allocation5 + $0xa] sm:$0x3]
    %v72 = vld [vmem:[#allocation5 + $0xc] sm:$0x3]
    %v73 = vld [vmem:[#allocation5 + $0xe] sm:$0x3]
    %v75 = vlaneseq
    %v76 = vshrl.u32 %v75, 7
    %v77 = vsub.s32 0, %v76
    %v78 = vrot.slane %v65, %v77
    %v88 = vcombine.low %v66, %v67
    %v89 = vcombine.low %v68, %v69
    %v91 = vunpack.c.l.s4 1983009808
    %v92 = vunpack.c.0.s8 %v91
    %v93 = vlaneseq
    %v94 = vshrl.u32 %v93, 7
    %v95 = vsub.s32 %v92, %v94
    %v96 = vrot.slane %v88, %v95
    %v98 = vunpack.c.l.s4 1983009808
    %v99 = vunpack.c.0.s8 %v98
    %v100 = vlaneseq
    %v101 = vshrl.u32 %v100, 7
    %v102 = vsub.s32 %v99, %v101
    %v103 = vrot.slane %v89, %v102
    %v104 = vcombine.low %v96, %v103
    %v105 = vcombine.low %v70, %v71
    %v106 = vcombine.low %v72, %v73
    %v108 = vunpack.c.l.s4 1983009808
    %v109 = vunpack.c.0.s8 %v108
    %v110 = vlaneseq
    %v111 = vshrl.u32 %v110, 7
    %v112 = vsub.s32 %v109, %v111
    %v113 = vrot.slane %v105, %v112
    %v115 = vunpack.c.l.s4 1983009808
    %v116 = vunpack.c.0.s8 %v115
    %v117 = vlaneseq
    %v118 = vshrl.u32 %v117, 7
    %v119 = vsub.s32 %v116, %v118
    %v120 = vrot.slane %v106, %v119
    %v121 = vcombine.low %v113, %v120
    %vm122 = vcmask 130048
    %v123 = vsel %vm122, %v104, 0
    %v125 = vsel %vm122, %v121, 0
    %127 = vmatprep.subr.mxu0 0.0
    %128 = vmatpush1.msra.mxu0 %v59
    %129 = vmatprep.subr.mxu0 0.0
    %130 = vmatpush1.msra.mxu0 %v60
    %131 = vmatprep.subr.mxu0 0.0
    %132 = vmatpush1.msra.mxu0 0.0
    %133 = vmatprep.subr.mxu0 0.0
    %134 = vmatpush1.msra.mxu0 0.0
    %135 = vmatprep.subr.mxu0 0.0
    %136 = vmatpush1.msra.mxu0 0.0
    %137 = vmatprep.subr.mxu0 0.0
    %138 = vmatpush1.msra.mxu0 0.0
    %139 = vmatprep.subr.mxu0 0.0
    %140 = vmatpush1.msra.mxu0 0.0
    %141 = vmatprep.subr.mxu0 0.0
    %142 = vmatpush1.msra.mxu0 0.0
    %143 = vmatprep.subr.mxu0 0.0
    %144 = vmatpush1.msra.mxu0 0.0
    %145 = vmatprep.subr.mxu0 0.0
    %146 = vmatpush1.msra.mxu0 0.0
    %147 = vmatprep.subr.mxu0 0.0
    %148 = vmatpush1.msra.mxu0 0.0
    %149 = vmatprep.subr.mxu0 0.0
    %150 = vmatpush1.msra.mxu0 0.0
    %151 = vmatprep.subr.mxu0 0.0
    %152 = vmatpush1.msra.mxu0 0.0
    %153 = vmatprep.subr.mxu0 0.0
    %154 = vmatpush1.msra.mxu0 0.0
    %155 = vmatprep.subr.mxu0 0.0
    %156 = vmatpush1.msra.mxu0 0.0
    %157 = vmatprep.subr.mxu0 0.0
    %158 = vmatpush1.msra.mxu0 0.0
    %159 = vmatprep.subr.mxu0 0.0
    %160 = vmatpush1.msra.mxu0 0.0
    %161 = vmatprep.subr.mxu0 0.0
    %162 = vmatpush1.msra.mxu0 0.0
    %163 = vmatprep.subr.mxu0 0.0
    %164 = vmatpush1.msra.mxu0 0.0
    %165 = vmatprep.subr.mxu0 0.0
    %166 = vmatpush1.msra.mxu0 0.0
    %167 = vmatprep.subr.mxu0 0.0
    %168 = vmatpush1.msra.mxu0 0.0
    %169 = vmatprep.subr.mxu0 0.0
    %170 = vmatpush1.msra.mxu0 0.0
    %171 = vmatprep.subr.mxu0 0.0
    %172 = vmatpush1.msra.mxu0 0.0
    %173 = vmatprep.subr.mxu0 0.0
    %174 = vmatpush1.msra.mxu0 0.0
    %175 = vmatprep.subr.mxu0 0.0
    %176 = vmatpush1.msra.mxu0 0.0
    %177 = vmatprep.subr.mxu0 0.0
    %178 = vmatpush1.msra.mxu0 0.0
    %179 = vmatprep.subr.mxu0 0.0
    %180 = vmatpush1.msra.mxu0 0.0
    %181 = vmatprep.subr.mxu0 0.0
    %182 = vmatpush1.msra.mxu0 0.0
    %183 = vmatprep.subr.mxu0 0.0
    %184 = vmatpush1.msra.mxu0 0.0
    %185 = vmatprep.subr.mxu0 0.0
    %186 = vmatpush1.msra.mxu0 0.0
    %187 = vmatprep.subr.mxu0 0.0
    %188 = vmatpush1.msra.mxu0 0.0
    %189 = vmatprep.subr.mxu0 0.0
    %190 = vmatpush1.msra.mxu0 0.0
    %191 = vmatprep.mubr.f32.mxu0 0.0
    %192 = vmatmul.mubr.f32.gmra.mrb[0].mxu0 %v123
    %v193 = vpop.f32.mrb[0].mxu0
    %v194 = vadd.f32 %v78, %v193
    %v195 = vpop.f32.mrb[0].mxu0
    %196 = vmatprep.mubr.f32.mxu0 0.0
    %197 = vmatmul.mubr.f32.gmra.mrb[0].mxu0 %v125
    %v198 = vpop.f32.mrb[0].mxu0
    %v199 = vadd.f32 %v78, %v198
    %v200 = vpop.f32.mrb[0].mxu0
    %201 = vdwg.mxu0
    %v204 = vcombine.high %v194, %v194
    %v206 = vunpack.c.l.s4 1983009808
    %v207 = vunpack.c.0.s8 %v206
    %v208 = vlaneseq
    %v209 = vshrl.u32 %v208, 7
    %v210 = vsub.s32 %v207, %v209
    %v211 = vrot.slane %v194, %v210
    %v213 = vunpack.c.l.s4 1983009808
    %v214 = vunpack.c.0.s8 %v213
    %v215 = vlaneseq
    %v216 = vshrl.u32 %v215, 7
    %v217 = vsub.s32 %v214, %v216
    %v218 = vrot.slane %v204, %v217
    %v219 = vcombine.high %v211, %v211
    %v220 = vcombine.high %v218, %v218
    %v221 = vcombine.high %v199, %v199
    %v223 = vunpack.c.l.s4 1983009808
    %v224 = vunpack.c.0.s8 %v223
    %v225 = vlaneseq
    %v226 = vshrl.u32 %v225, 7
    %v227 = vsub.s32 %v224, %v226
    %v228 = vrot.slane %v199, %v227
    %v230 = vunpack.c.l.s4 1983009808
    %v231 = vunpack.c.0.s8 %v230
    %v232 = vlaneseq
    %v233 = vshrl.u32 %v232, 7
    %v234 = vsub.s32 %v231, %v233
    %v235 = vrot.slane %v221, %v234
    %v236 = vcombine.high %v228, %v228
    %v237 = vcombine.high %v235, %v235
    %246 = vst [vmem:[#allocation2] sm:$0x3] %v211
    %247 = vst [vmem:[#allocation2 + $0x2] sm:$0x3] %v219
    %248 = vst [vmem:[#allocation2 + $0x4] sm:$0x3] %v218
    %249 = vst [vmem:[#allocation2 + $0x6] sm:$0x3] %v220
    %250 = vst [vmem:[#allocation2 + $0x8] sm:$0x3] %v228
    %251 = vst [vmem:[#allocation2 + $0xa] sm:$0x3] %v236
    %252 = vst [vmem:[#allocation2 + $0xc] sm:$0x3] %v235
    %253 = vst [vmem:[#allocation2 + $0xe] sm:$0x3] %v237
    %vm254 = vcmask 261120
    %v256 = vsel %vm254, 0.0, 0
    %258 = vmatprep.subr.mxu0 0.0
    %259 = vmatpush1.msra.mxu0 %v61
    %260 = vmatprep.subr.mxu0 0.0
    %261 = vmatpush1.msra.mxu0 %v62
    %262 = vmatprep.subr.mxu0 0.0
    %263 = vmatpush1.msra.mxu0 %v63
    %264 = vmatprep.subr.mxu0 0.0
    %265 = vmatpush1.msra.mxu0 %v64
    %266 = vmatprep.subr.mxu0 0.0
    %267 = vmatpush1.msra.mxu0 0.0
    %268 = vmatprep.subr.mxu0 0.0
    %269 = vmatpush1.msra.mxu0 0.0
    %270 = vmatprep.subr.mxu0 0.0
    %271 = vmatpush1.msra.mxu0 0.0
    %272 = vmatprep.subr.mxu0 0.0
    %273 = vmatpush1.msra.mxu0 0.0
    %274 = vmatprep.subr.mxu0 0.0
    %275 = vmatpush1.msra.mxu0 0.0
    %276 = vmatprep.subr.mxu0 0.0
    %277 = vmatpush1.msra.mxu0 0.0
    %278 = vmatprep.subr.mxu0 0.0
    %279 = vmatpush1.msra.mxu0 0.0
    %280 = vmatprep.subr.mxu0 0.0
    %281 = vmatpush1.msra.mxu0 0.0
    %282 = vmatprep.subr.mxu0 0.0
    %283 = vmatpush1.msra.mxu0 0.0
    %284 = vmatprep.subr.mxu0 0.0
    %285 = vmatpush1.msra.mxu0 0.0
    %286 = vmatprep.subr.mxu0 0.0
    %287 = vmatpush1.msra.mxu0 0.0
    %288 = vmatprep.subr.mxu0 0.0
    %289 = vmatpush1.msra.mxu0 0.0
    %290 = vmatprep.subr.mxu0 0.0
    %291 = vmatpush1.msra.mxu0 0.0
    %292 = vmatprep.subr.mxu0 0.0
    %293 = vmatpush1.msra.mxu0 0.0
    %294 = vmatprep.subr.mxu0 0.0
    %295 = vmatpush1.msra.mxu0 0.0
    %296 = vmatprep.subr.mxu0 0.0
    %297 = vmatpush1.msra.mxu0 0.0
    %298 = vmatprep.subr.mxu0 0.0
    %299 = vmatpush1.msra.mxu0 0.0
    %300 = vmatprep.subr.mxu0 0.0
    %301 = vmatpush1.msra.mxu0 0.0
    %302 = vmatprep.subr.mxu0 0.0
    %303 = vmatpush1.msra.mxu0 0.0
    %304 = vmatprep.subr.mxu0 0.0
    %305 = vmatpush1.msra.mxu0 0.0
    %306 = vmatprep.subr.mxu0 0.0
    %307 = vmatpush1.msra.mxu0 0.0
    %308 = vmatprep.subr.mxu0 0.0
    %309 = vmatpush1.msra.mxu0 0.0
    %310 = vmatprep.subr.mxu0 0.0
    %311 = vmatpush1.msra.mxu0 0.0
    %312 = vmatprep.subr.mxu0 0.0
    %313 = vmatpush1.msra.mxu0 0.0
    %314 = vmatprep.subr.mxu0 0.0
    %315 = vmatpush1.msra.mxu0 0.0
    %316 = vmatprep.subr.mxu0 0.0
    %317 = vmatpush1.msra.mxu0 0.0
    %318 = vmatprep.subr.mxu0 0.0
    %319 = vmatpush1.msra.mxu0 0.0
    %320 = vmatprep.subr.mxu0 0.0
    %321 = vmatpush1.msra.mxu0 0.0
    %322 = vmatprep.mubr.f32.mxu0 0.0
    %323 = vmatmul.mubr.f32.gmra.mrb[0].mxu0 %v256
    %v324 = vpop.f32.mrb[0].mxu0
    %v325 = vadd.f32 0.0, %v324
    %v326 = vpop.f32.mrb[0].mxu0
    %327 = vdwg.mxu0
    %v328 = vld [vmem:[#allocation2] sm:$0x3]
    %v329 = vadd.f32 %v328, %v325
    %s330 = scalar_lea.vmem [#allocation2], 14
    %v331 = vld [vmem:[%s330] sm:$0x3]
    %v332 = vadd.f32 %v331, %v325
    %v333 = vxor.u32 %v329, 2147483648
    %v334 = vmul.f32 %v333, 1.442695
    %v335 = vpow.pop %v334
    %v336 = vadd.f32 %v335, 1.0
    %v337 = vrcp.pop %v336
    %v338 = vmul.f32 1.0, %v337
    %v339 = vtanh.pop %v329
    %v340 = vmul.f32 %v338, 0.0
    %342 = vrot.lane.b32.xlu0 %v339, 96
    %v343 = vpop.permute.xlu0 %342
    %v345 = vmul.f32 %v338, %v343
    %347 = vrot.lane.b32.xlu0 %v345, 16
    %v348 = vpop.permute.xlu0 %347
    %v350 = vadd.f32 %v340, %v348
    %v351 = vtanh.pop %v350
    %353 = vrot.lane.b32.xlu0 %v351, 32
    %v354 = vpop.permute.xlu0 %353
    %v356 = vmul.f32 %v338, %v354
    %v357 = vxor.u32 %v332, 2147483648
    %v358 = vmul.f32 %v357, 1.442695
    %v359 = vpow.pop %v358
    %v360 = vadd.f32 %v359, 1.0
    %v361 = vrcp.pop %v360
    %v362 = vmul.f32 1.0, %v361
    %v363 = vtanh.pop %v332
    %v364 = vmul.f32 %v362, 0.0
    %366 = vrot.lane.b32.xlu0 %v363, 96
    %v367 = vpop.permute.xlu0 %366
    %v369 = vmul.f32 %v362, %v367
    %371 = vrot.lane.b32.xlu0 %v369, 16
    %v372 = vpop.permute.xlu0 %371
    %v374 = vadd.f32 %v364, %v372
    %v375 = vtanh.pop %v374
    %377 = vrot.lane.b32.xlu0 %v375, 32
    %v378 = vpop.permute.xlu0 %377
    %v380 = vmul.f32 %v362, %v378
    %382 = vrot.lane.b32.xlu0 %v356, 80
    %v383 = vpop.permute.xlu0 %382
    %vm385 = vcmask 123904
    %386 = vst.msk [vmem:[#allocation3] sm:$0x3] %vm385, %v383
    %388 = vrot.lane.b32.xlu0 %v380, 16
    %v389 = vpop.permute.xlu0 %388
    %s391 = scalar_lea.vmem [#allocation4], 14
    %392 = vst.msk [vmem:[%s391] sm:$0x3] %vm385, %v389
    %393 = vrot.lane.b32.xlu0 %v380, 32
    %v394 = vpop.permute.xlu0 %393
    %v396 = vsel %vm122, %v383, %v394
    %v398 = vsel %vm254, %v396, 0
    %400 = vmatprep.subr.mxu0 0.0
    %401 = vmatpush1.msra.mxu0 %v61
    %402 = vmatprep.subr.mxu0 0.0
    %403 = vmatpush1.msra.mxu0 %v62
    %404 = vmatprep.subr.mxu0 0.0
    %405 = vmatpush1.msra.mxu0 %v63
    %406 = vmatprep.subr.mxu0 0.0
    %407 = vmatpush1.msra.mxu0 %v64
    %408 = vmatprep.subr.mxu0 0.0
    %409 = vmatpush1.msra.mxu0 0.0
    %410 = vmatprep.subr.mxu0 0.0
    %411 = vmatpush1.msra.mxu0 0.0
    %412 = vmatprep.subr.mxu0 0.0
    %413 = vmatpush1.msra.mxu0 0.0
    %414 = vmatprep.subr.mxu0 0.0
    %415 = vmatpush1.msra.mxu0 0.0
    %416 = vmatprep.subr.mxu0 0.0
    %417 = vmatpush1.msra.mxu0 0.0
    %418 = vmatprep.subr.mxu0 0.0
    %419 = vmatpush1.msra.mxu0 0.0
    %420 = vmatprep.subr.mxu0 0.0
    %421 = vmatpush1.msra.mxu0 0.0
    %422 = vmatprep.subr.mxu0 0.0
    %423 = vmatpush1.msra.mxu0 0.0
    %424 = vmatprep.subr.mxu0 0.0
    %425 = vmatpush1.msra.mxu0 0.0
    %426 = vmatprep.subr.mxu0 0.0
    %427 = vmatpush1.msra.mxu0 0.0
    %428 = vmatprep.subr.mxu0 0.0
    %429 = vmatpush1.msra.mxu0 0.0
    %430 = vmatprep.subr.mxu0 0.0
    %431 = vmatpush1.msra.mxu0 0.0
    %432 = vmatprep.subr.mxu0 0.0
    %433 = vmatpush1.msra.mxu0 0.0
    %434 = vmatprep.subr.mxu0 0.0
    %435 = vmatpush1.msra.mxu0 0.0
    %436 = vmatprep.subr.mxu0 0.0
    %437 = vmatpush1.msra.mxu0 0.0
    %438 = vmatprep.subr.mxu0 0.0
    %439 = vmatpush1.msra.mxu0 0.0
    %440 = vmatprep.subr.mxu0 0.0
    %441 = vmatpush1.msra.mxu0 0.0
    %442 = vmatprep.subr.mxu0 0.0
    %443 = vmatpush1.msra.mxu0 0.0
    %444 = vmatprep.subr.mxu0 0.0
    %445 = vmatpush1.msra.mxu0 0.0
    %446 = vmatprep.subr.mxu0 0.0
    %447 = vmatpush1.msra.mxu0 0.0
    %448 = vmatprep.subr.mxu0 0.0
    %449 = vmatpush1.msra.mxu0 0.0
    %450 = vmatprep.subr.mxu0 0.0
    %451 = vmatpush1.msra.mxu0 0.0
    %452 = vmatprep.subr.mxu0 0.0
    %453 = vmatpush1.msra.mxu0 0.0
    %454 = vmatprep.subr.mxu0 0.0
    %455 = vmatpush1.msra.mxu0 0.0
    %456 = vmatprep.subr.mxu0 0.0
    %457 = vmatpush1.msra.mxu0 0.0
    %458 = vmatprep.subr.mxu0 0.0
    %459 = vmatpush1.msra.mxu0 0.0
    %460 = vmatprep.subr.mxu0 0.0
    %461 = vmatpush1.msra.mxu0 0.0
    %462 = vmatprep.subr.mxu0 0.0
    %463 = vmatpush1.msra.mxu0 0.0
    %464 = vmatprep.mubr.f32.mxu0 0.0
    %465 = vmatmul.mubr.f32.gmra.mrb[0].mxu0 %v398
    %v466 = vpop.f32.mrb[0].mxu0
    %v467 = vadd.f32 0.0, %v466
    %v468 = vpop.f32.mrb[0].mxu0
    %469 = vdwg.mxu0
    %s470 = scalar_lea.vmem [#allocation2], 2
    %v471 = vld [vmem:[%s470] sm:$0x3]
    %v472 = vadd.f32 %v471, %v467
    %s473 = scalar_lea.vmem [#allocation2], 12
    %v474 = vld [vmem:[%s473] sm:$0x3]
    %v475 = vadd.f32 %v474, %v467
    %v476 = vxor.u32 %v472, 2147483648
    %v477 = vmul.f32 %v476, 1.442695
    %v478 = vpow.pop %v477
    %v479 = vadd.f32 %v478, 1.0
    %v480 = vrcp.pop %v479
    %v481 = vmul.f32 1.0, %v480
    %v482 = vtanh.pop %v472
    %v483 = vmul.f32 %v481, %v350
    %485 = vrot.lane.b32.xlu0 %v482, 96
    %v486 = vpop.permute.xlu0 %485
    %v488 = vmul.f32 %v481, %v486
    %490 = vrot.lane.b32.xlu0 %v488, 16
    %v491 = vpop.permute.xlu0 %490
    %v493 = vadd.f32 %v483, %v491
    %v494 = vtanh.pop %v493
    %496 = vrot.lane.b32.xlu0 %v494, 32
    %v497 = vpop.permute.xlu0 %496
    %v499 = vmul.f32 %v481, %v497
    %v500 = vxor.u32 %v475, 2147483648
    %v501 = vmul.f32 %v500, 1.442695
    %v502 = vpow.pop %v501
    %v503 = vadd.f32 %v502, 1.0
    %v504 = vrcp.pop %v503
    %v505 = vmul.f32 1.0, %v504
    %v506 = vtanh.pop %v475
    %v507 = vmul.f32 %v505, %v374
    %509 = vrot.lane.b32.xlu0 %v506, 96
    %v510 = vpop.permute.xlu0 %509
    %v512 = vmul.f32 %v505, %v510
    %514 = vrot.lane.b32.xlu0 %v512, 16
    %v515 = vpop.permute.xlu0 %514
    %v517 = vadd.f32 %v507, %v515
    %v518 = vtanh.pop %v517
    %520 = vrot.lane.b32.xlu0 %v518, 32
    %v521 = vpop.permute.xlu0 %520
    %v523 = vmul.f32 %v505, %v521
    %525 = vrot.lane.b32.xlu0 %v499, 80
    %v526 = vpop.permute.xlu0 %525
    %s528 = scalar_lea.vmem [#allocation3], 2
    %529 = vst.msk [vmem:[%s528] sm:$0x3] %vm385, %v526
    %531 = vrot.lane.b32.xlu0 %v523, 16
    %v532 = vpop.permute.xlu0 %531
    %s534 = scalar_lea.vmem [#allocation4], 12
    %535 = vst.msk [vmem:[%s534] sm:$0x3] %vm385, %v532
    %536 = vrot.lane.b32.xlu0 %v523, 32
    %v537 = vpop.permute.xlu0 %536
    %v539 = vsel %vm122, %v526, %v537
    %v541 = vsel %vm254, %v539, 0
    %543 = vmatprep.subr.mxu0 0.0
    %544 = vmatpush1.msra.mxu0 %v61
    %545 = vmatprep.subr.mxu0 0.0
    %546 = vmatpush1.msra.mxu0 %v62
    %547 = vmatprep.subr.mxu0 0.0
    %548 = vmatpush1.msra.mxu0 %v63
    %549 = vmatprep.subr.mxu0 0.0
    %550 = vmatpush1.msra.mxu0 %v64
    %551 = vmatprep.subr.mxu0 0.0
    %552 = vmatpush1.msra.mxu0 0.0
    %553 = vmatprep.subr.mxu0 0.0
    %554 = vmatpush1.msra.mxu0 0.0
    %555 = vmatprep.subr.mxu0 0.0
    %556 = vmatpush1.msra.mxu0 0.0
    %557 = vmatprep.subr.mxu0 0.0
    %558 = vmatpush1.msra.mxu0 0.0
    %559 = vmatprep.subr.mxu0 0.0
    %560 = vmatpush1.msra.mxu0 0.0
    %561 = vmatprep.subr.mxu0 0.0
    %562 = vmatpush1.msra.mxu0 0.0
    %563 = vmatprep.subr.mxu0 0.0
    %564 = vmatpush1.msra.mxu0 0.0
    %565 = vmatprep.subr.mxu0 0.0
    %566 = vmatpush1.msra.mxu0 0.0
    %567 = vmatprep.subr.mxu0 0.0
    %568 = vmatpush1.msra.mxu0 0.0
    %569 = vmatprep.subr.mxu0 0.0
    %570 = vmatpush1.msra.mxu0 0.0
    %571 = vmatprep.subr.mxu0 0.0
    %572 = vmatpush1.msra.mxu0 0.0
    %573 = vmatprep.subr.mxu0 0.0
    %574 = vmatpush1.msra.mxu0 0.0
    %575 = vmatprep.subr.mxu0 0.0
    %576 = vmatpush1.msra.mxu0 0.0
    %577 = vmatprep.subr.mxu0 0.0
    %578 = vmatpush1.msra.mxu0 0.0
    %579 = vmatprep.subr.mxu0 0.0
    %580 = vmatpush1.msra.mxu0 0.0
    %581 = vmatprep.subr.mxu0 0.0
    %582 = vmatpush1.msra.mxu0 0.0
    %583 = vmatprep.subr.mxu0 0.0
    %584 = vmatpush1.msra.mxu0 0.0
    %585 = vmatprep.subr.mxu0 0.0
    %586 = vmatpush1.msra.mxu0 0.0
    %587 = vmatprep.subr.mxu0 0.0
    %588 = vmatpush1.msra.mxu0 0.0
    %589 = vmatprep.subr.mxu0 0.0
    %590 = vmatpush1.msra.mxu0 0.0
    %591 = vmatprep.subr.mxu0 0.0
    %592 = vmatpush1.msra.mxu0 0.0
    %593 = vmatprep.subr.mxu0 0.0
    %594 = vmatpush1.msra.mxu0 0.0
    %595 = vmatprep.subr.mxu0 0.0
    %596 = vmatpush1.msra.mxu0 0.0
    %597 = vmatprep.subr.mxu0 0.0
    %598 = vmatpush1.msra.mxu0 0.0
    %599 = vmatprep.subr.mxu0 0.0
    %600 = vmatpush1.msra.mxu0 0.0
    %601 = vmatprep.subr.mxu0 0.0
    %602 = vmatpush1.msra.mxu0 0.0
    %603 = vmatprep.subr.mxu0 0.0
    %604 = vmatpush1.msra.mxu0 0.0
    %605 = vmatprep.subr.mxu0 0.0
    %606 = vmatpush1.msra.mxu0 0.0
    %607 = vmatprep.mubr.f32.mxu0 0.0
    %608 = vmatmul.mubr.f32.gmra.mrb[0].mxu0 %v541
    %v609 = vpop.f32.mrb[0].mxu0
    %v610 = vadd.f32 0.0, %v609
    %v611 = vpop.f32.mrb[0].mxu0
    %612 = vdwg.mxu0
    %s613 = scalar_lea.vmem [#allocation2], 4
    %v614 = vld [vmem:[%s613] sm:$0x3]
    %v615 = vadd.f32 %v614, %v610
    %s616 = scalar_lea.vmem [#allocation2], 10
    %v617 = vld [vmem:[%s616] sm:$0x3]
    %v618 = vadd.f32 %v617, %v610
    %v619 = vxor.u32 %v615, 2147483648
    %v620 = vmul.f32 %v619, 1.442695
    %v621 = vpow.pop %v620
    %v622 = vadd.f32 %v621, 1.0
    %v623 = vrcp.pop %v622
    %v624 = vmul.f32 1.0, %v623
    %v625 = vtanh.pop %v615
    %v626 = vmul.f32 %v624, %v493
    %628 = vrot.lane.b32.xlu0 %v625, 96
    %v629 = vpop.permute.xlu0 %628
    %v631 = vmul.f32 %v624, %v629
    %633 = vrot.lane.b32.xlu0 %v631, 16
    %v634 = vpop.permute.xlu0 %633
    %v636 = vadd.f32 %v626, %v634
    %v637 = vtanh.pop %v636
    %639 = vrot.lane.b32.xlu0 %v637, 32
    %v640 = vpop.permute.xlu0 %639
    %v642 = vmul.f32 %v624, %v640
    %v643 = vxor.u32 %v618, 2147483648
    %v644 = vmul.f32 %v643, 1.442695
    %v645 = vpow.pop %v644
    %v646 = vadd.f32 %v645, 1.0
    %v647 = vrcp.pop %v646
    %v648 = vmul.f32 1.0, %v647
    %v649 = vtanh.pop %v618
    %v650 = vmul.f32 %v648, %v517
    %652 = vrot.lane.b32.xlu0 %v649, 96
    %v653 = vpop.permute.xlu0 %652
    %v655 = vmul.f32 %v648, %v653
    %657 = vrot.lane.b32.xlu0 %v655, 16
    %v658 = vpop.permute.xlu0 %657
    %v660 = vadd.f32 %v650, %v658
    %v661 = vtanh.pop %v660
    %663 = vrot.lane.b32.xlu0 %v661, 32
    %v664 = vpop.permute.xlu0 %663
    %v666 = vmul.f32 %v648, %v664
    %668 = vrot.lane.b32.xlu0 %v642, 80
    %v669 = vpop.permute.xlu0 %668
    %s671 = scalar_lea.vmem [#allocation3], 4
    %672 = vst.msk [vmem:[%s671] sm:$0x3] %vm385, %v669
    %674 = vrot.lane.b32.xlu0 %v666, 16
    %v675 = vpop.permute.xlu0 %674
    %s677 = scalar_lea.vmem [#allocation4], 10
    %678 = vst.msk [vmem:[%s677] sm:$0x3] %vm385, %v675
    %679 = vrot.lane.b32.xlu0 %v666, 32
    %v680 = vpop.permute.xlu0 %679
    %v682 = vsel %vm122, %v669, %v680
    %v684 = vsel %vm254, %v682, 0
    %686 = vmatprep.subr.mxu0 0.0
    %687 = vmatpush1.msra.mxu0 %v61
    %688 = vmatprep.subr.mxu0 0.0
    %689 = vmatpush1.msra.mxu0 %v62
    %690 = vmatprep.subr.mxu0 0.0
    %691 = vmatpush1.msra.mxu0 %v63
    %692 = vmatprep.subr.mxu0 0.0
    %693 = vmatpush1.msra.mxu0 %v64
    %694 = vmatprep.subr.mxu0 0.0
    %695 = vmatpush1.msra.mxu0 0.0
    %696 = vmatprep.subr.mxu0 0.0
    %697 = vmatpush1.msra.mxu0 0.0
    %698 = vmatprep.subr.mxu0 0.0
    %699 = vmatpush1.msra.mxu0 0.0
    %700 = vmatprep.subr.mxu0 0.0
    %701 = vmatpush1.msra.mxu0 0.0
    %702 = vmatprep.subr.mxu0 0.0
    %703 = vmatpush1.msra.mxu0 0.0
    %704 = vmatprep.subr.mxu0 0.0
    %705 = vmatpush1.msra.mxu0 0.0
    %706 = vmatprep.subr.mxu0 0.0
    %707 = vmatpush1.msra.mxu0 0.0
    %708 = vmatprep.subr.mxu0 0.0
    %709 = vmatpush1.msra.mxu0 0.0
    %710 = vmatprep.subr.mxu0 0.0
    %711 = vmatpush1.msra.mxu0 0.0
    %712 = vmatprep.subr.mxu0 0.0
    %713 = vmatpush1.msra.mxu0 0.0
    %714 = vmatprep.subr.mxu0 0.0
    %715 = vmatpush1.msra.mxu0 0.0
    %716 = vmatprep.subr.mxu0 0.0
    %717 = vmatpush1.msra.mxu0 0.0
    %718 = vmatprep.subr.mxu0 0.0
    %719 = vmatpush1.msra.mxu0 0.0
    %720 = vmatprep.subr.mxu0 0.0
    %721 = vmatpush1.msra.mxu0 0.0
    %722 = vmatprep.subr.mxu0 0.0
    %723 = vmatpush1.msra.mxu0 0.0
    %724 = vmatprep.subr.mxu0 0.0
    %725 = vmatpush1.msra.mxu0 0.0
    %726 = vmatprep.subr.mxu0 0.0
    %727 = vmatpush1.msra.mxu0 0.0
    %728 = vmatprep.subr.mxu0 0.0
    %729 = vmatpush1.msra.mxu0 0.0
    %730 = vmatprep.subr.mxu0 0.0
    %731 = vmatpush1.msra.mxu0 0.0
    %732 = vmatprep.subr.mxu0 0.0
    %733 = vmatpush1.msra.mxu0 0.0
    %734 = vmatprep.subr.mxu0 0.0
    %735 = vmatpush1.msra.mxu0 0.0
    %736 = vmatprep.subr.mxu0 0.0
    %737 = vmatpush1.msra.mxu0 0.0
    %738 = vmatprep.subr.mxu0 0.0
    %739 = vmatpush1.msra.mxu0 0.0
    %740 = vmatprep.subr.mxu0 0.0
    %741 = vmatpush1.msra.mxu0 0.0
    %742 = vmatprep.subr.mxu0 0.0
    %743 = vmatpush1.msra.mxu0 0.0
    %744 = vmatprep.subr.mxu0 0.0
    %745 = vmatpush1.msra.mxu0 0.0
    %746 = vmatprep.subr.mxu0 0.0
    %747 = vmatpush1.msra.mxu0 0.0
    %748 = vmatprep.subr.mxu0 0.0
    %749 = vmatpush1.msra.mxu0 0.0
    %750 = vmatprep.mubr.f32.mxu0 0.0
    %751 = vmatmul.mubr.f32.gmra.mrb[0].mxu0 %v684
    %v752 = vpop.f32.mrb[0].mxu0
    %v753 = vadd.f32 0.0, %v752
    %v754 = vpop.f32.mrb[0].mxu0
    %755 = vdwg.mxu0
    %s756 = scalar_lea.vmem [#allocation2], 6
    %v757 = vld [vmem:[%s756] sm:$0x3]
    %v758 = vadd.f32 %v757, %v753
    %s759 = scalar_lea.vmem [#allocation2], 8
    %v760 = vld [vmem:[%s759] sm:$0x3]
    %v761 = vadd.f32 %v760, %v753
    %v762 = vxor.u32 %v758, 2147483648
    %v763 = vmul.f32 %v762, 1.442695
    %v764 = vpow.pop %v763
    %v765 = vadd.f32 %v764, 1.0
    %v766 = vrcp.pop %v765
    %v767 = vmul.f32 1.0, %v766
    %v768 = vtanh.pop %v758
    %v769 = vmul.f32 %v767, %v636
    %771 = vrot.lane.b32.xlu0 %v768, 96
    %v772 = vpop.permute.xlu0 %771
    %v774 = vmul.f32 %v767, %v772
    %776 = vrot.lane.b32.xlu0 %v774, 16
    %v777 = vpop.permute.xlu0 %776
    %v779 = vadd.f32 %v769, %v777
    %v780 = vtanh.pop %v779
    %782 = vrot.lane.b32.xlu0 %v780, 32
    %v783 = vpop.permute.xlu0 %782
    %v785 = vmul.f32 %v767, %v783
    %v786 = vxor.u32 %v761, 2147483648
    %v787 = vmul.f32 %v786, 1.442695
    %v788 = vpow.pop %v787
    %v789 = vadd.f32 %v788, 1.0
    %v790 = vrcp.pop %v789
    %v791 = vmul.f32 1.0, %v790
    %v792 = vtanh.pop %v761
    %v793 = vmul.f32 %v791, %v660
    %795 = vrot.lane.b32.xlu0 %v792, 96
    %v796 = vpop.permute.xlu0 %795
    %v798 = vmul.f32 %v791, %v796
    %800 = vrot.lane.b32.xlu0 %v798, 16
    %v801 = vpop.permute.xlu0 %800
    %v803 = vadd.f32 %v793, %v801
    %v804 = vtanh.pop %v803
    %806 = vrot.lane.b32.xlu0 %v804, 32
    %v807 = vpop.permute.xlu0 %806
    %v809 = vmul.f32 %v791, %v807
    %811 = vrot.lane.b32.xlu0 %v785, 80
    %v812 = vpop.permute.xlu0 %811
    %s814 = scalar_lea.vmem [#allocation3], 6
    %815 = vst.msk [vmem:[%s814] sm:$0x3] %vm385, %v812
    %817 = vrot.lane.b32.xlu0 %v809, 16
    %v818 = vpop.permute.xlu0 %817
    %s820 = scalar_lea.vmem [#allocation4], 8
    %821 = vst.msk [vmem:[%s820] sm:$0x3] %vm385, %v818
    %822 = vrot.lane.b32.xlu0 %v809, 32
    %v823 = vpop.permute.xlu0 %822
    %v825 = vsel %vm122, %v812, %v823
    %v827 = vsel %vm254, %v825, 0
    %829 = vmatprep.subr.mxu0 0.0
    %830 = vmatpush1.msra.mxu0 %v61
    %831 = vmatprep.subr.mxu0 0.0
    %832 = vmatpush1.msra.mxu0 %v62
    %833 = vmatprep.subr.mxu0 0.0
    %834 = vmatpush1.msra.mxu0 %v63
    %835 = vmatprep.subr.mxu0 0.0
    %836 = vmatpush1.msra.mxu0 %v64
    %837 = vmatprep.subr.mxu0 0.0
    %838 = vmatpush1.msra.mxu0 0.0
    %839 = vmatprep.subr.mxu0 0.0
    %840 = vmatpush1.msra.mxu0 0.0
    %841 = vmatprep.subr.mxu0 0.0
    %842 = vmatpush1.msra.mxu0 0.0
    %843 = vmatprep.subr.mxu0 0.0
    %844 = vmatpush1.msra.mxu0 0.0
    %845 = vmatprep.subr.mxu0 0.0
    %846 = vmatpush1.msra.mxu0 0.0
    %847 = vmatprep.subr.mxu0 0.0
    %848 = vmatpush1.msra.mxu0 0.0
    %849 = vmatprep.subr.mxu0 0.0
    %850 = vmatpush1.msra.mxu0 0.0
    %851 = vmatprep.subr.mxu0 0.0
    %852 = vmatpush1.msra.mxu0 0.0
    %853 = vmatprep.subr.mxu0 0.0
    %854 = vmatpush1.msra.mxu0 0.0
    %855 = vmatprep.subr.mxu0 0.0
    %856 = vmatpush1.msra.mxu0 0.0
    %857 = vmatprep.subr.mxu0 0.0
    %858 = vmatpush1.msra.mxu0 0.0
    %859 = vmatprep.subr.mxu0 0.0
    %860 = vmatpush1.msra.mxu0 0.0
    %861 = vmatprep.subr.mxu0 0.0
    %862 = vmatpush1.msra.mxu0 0.0
    %863 = vmatprep.subr.mxu0 0.0
    %864 = vmatpush1.msra.mxu0 0.0
    %865 = vmatprep.subr.mxu0 0.0
    %866 = vmatpush1.msra.mxu0 0.0
    %867 = vmatprep.subr.mxu0 0.0
    %868 = vmatpush1.msra.mxu0 0.0
    %869 = vmatprep.subr.mxu0 0.0
    %870 = vmatpush1.msra.mxu0 0.0
    %871 = vmatprep.subr.mxu0 0.0
    %872 = vmatpush1.msra.mxu0 0.0
    %873 = vmatprep.subr.mxu0 0.0
    %874 = vmatpush1.msra.mxu0 0.0
    %875 = vmatprep.subr.mxu0 0.0
    %876 = vmatpush1.msra.mxu0 0.0
    %877 = vmatprep.subr.mxu0 0.0
    %878 = vmatpush1.msra.mxu0 0.0
    %879 = vmatprep.subr.mxu0 0.0
    %880 = vmatpush1.msra.mxu0 0.0
    %881 = vmatprep.subr.mxu0 0.0
    %882 = vmatpush1.msra.mxu0 0.0
    %883 = vmatprep.subr.mxu0 0.0
    %884 = vmatpush1.msra.mxu0 0.0
    %885 = vmatprep.subr.mxu0 0.0
    %886 = vmatpush1.msra.mxu0 0.0
    %887 = vmatprep.subr.mxu0 0.0
    %888 = vmatpush1.msra.mxu0 0.0
    %889 = vmatprep.subr.mxu0 0.0
    %890 = vmatpush1.msra.mxu0 0.0
    %891 = vmatprep.subr.mxu0 0.0
    %892 = vmatpush1.msra.mxu0 0.0
    %893 = vmatprep.mubr.f32.mxu0 0.0
    %894 = vmatmul.mubr.f32.gmra.mrb[0].mxu0 %v827
    %v895 = vpop.f32.mrb[0].mxu0
    %v896 = vadd.f32 0.0, %v895
    %v897 = vpop.f32.mrb[0].mxu0
    %898 = vdwg.mxu0
    %v899 = vld [vmem:[%s759] sm:$0x3]
    %v900 = vadd.f32 %v899, %v896
    %v901 = vld [vmem:[%s756] sm:$0x3]
    %v902 = vadd.f32 %v901, %v896
    %v903 = vxor.u32 %v900, 2147483648
    %v904 = vmul.f32 %v903, 1.442695
    %v905 = vpow.pop %v904
    %v906 = vadd.f32 %v905, 1.0
    %v907 = vrcp.pop %v906
    %v908 = vmul.f32 1.0, %v907
    %v909 = vtanh.pop %v900
    %v910 = vmul.f32 %v908, %v779
    %912 = vrot.lane.b32.xlu0 %v909, 96
    %v913 = vpop.permute.xlu0 %912
    %v915 = vmul.f32 %v908, %v913
    %917 = vrot.lane.b32.xlu0 %v915, 16
    %v918 = vpop.permute.xlu0 %917
    %v920 = vadd.f32 %v910, %v918
    %v921 = vtanh.pop %v920
    %923 = vrot.lane.b32.xlu0 %v921, 32
    %v924 = vpop.permute.xlu0 %923
    %v926 = vmul.f32 %v908, %v924
    %v927 = vxor.u32 %v902, 2147483648
    %v928 = vmul.f32 %v927, 1.442695
    %v929 = vpow.pop %v928
    %v930 = vadd.f32 %v929, 1.0
    %v931 = vrcp.pop %v930
    %v932 = vmul.f32 1.0, %v931
    %v933 = vtanh.pop %v902
    %v934 = vmul.f32 %v932, %v803
    %936 = vrot.lane.b32.xlu0 %v933, 96
    %v937 = vpop.permute.xlu0 %936
    %v939 = vmul.f32 %v932, %v937
    %941 = vrot.lane.b32.xlu0 %v939, 16
    %v942 = vpop.permute.xlu0 %941
    %v944 = vadd.f32 %v934, %v942
    %v945 = vtanh.pop %v944
    %947 = vrot.lane.b32.xlu0 %v945, 32
    %v948 = vpop.permute.xlu0 %947
    %v950 = vmul.f32 %v932, %v948
    %952 = vrot.lane.b32.xlu0 %v926, 80
    %v953 = vpop.permute.xlu0 %952
    %s955 = scalar_lea.vmem [#allocation3], 8
    %956 = vst.msk [vmem:[%s955] sm:$0x3] %vm385, %v953
    %958 = vrot.lane.b32.xlu0 %v950, 16
    %v959 = vpop.permute.xlu0 %958
    %s961 = scalar_lea.vmem [#allocation4], 6
    %962 = vst.msk [vmem:[%s961] sm:$0x3] %vm385, %v959
    %963 = vrot.lane.b32.xlu0 %v950, 32
    %v964 = vpop.permute.xlu0 %963
    %v966 = vsel %vm122, %v953, %v964
    %v968 = vsel %vm254, %v966, 0
    %970 = vmatprep.subr.mxu0 0.0
    %971 = vmatpush1.msra.mxu0 %v61
    %972 = vmatprep.subr.mxu0 0.0
    %973 = vmatpush1.msra.mxu0 %v62
    %974 = vmatprep.subr.mxu0 0.0
    %975 = vmatpush1.msra.mxu0 %v63
    %976 = vmatprep.subr.mxu0 0.0
    %977 = vmatpush1.msra.mxu0 %v64
    %978 = vmatprep.subr.mxu0 0.0
    %979 = vmatpush1.msra.mxu0 0.0
    %980 = vmatprep.subr.mxu0 0.0
    %981 = vmatpush1.msra.mxu0 0.0
    %982 = vmatprep.subr.mxu0 0.0
    %983 = vmatpush1.msra.mxu0 0.0
    %984 = vmatprep.subr.mxu0 0.0
    %985 = vmatpush1.msra.mxu0 0.0
    %986 = vmatprep.subr.mxu0 0.0
    %987 = vmatpush1.msra.mxu0 0.0
    %988 = vmatprep.subr.mxu0 0.0
    %989 = vmatpush1.msra.mxu0 0.0
    %990 = vmatprep.subr.mxu0 0.0
    %991 = vmatpush1.msra.mxu0 0.0
    %992 = vmatprep.subr.mxu0 0.0
    %993 = vmatpush1.msra.mxu0 0.0
    %994 = vmatprep.subr.mxu0 0.0
    %995 = vmatpush1.msra.mxu0 0.0
    %996 = vmatprep.subr.mxu0 0.0
    %997 = vmatpush1.msra.mxu0 0.0
    %998 = vmatprep.subr.mxu0 0.0
    %999 = vmatpush1.msra.mxu0 0.0
    %1000 = vmatprep.subr.mxu0 0.0
    %1001 = vmatpush1.msra.mxu0 0.0
    %1002 = vmatprep.subr.mxu0 0.0
    %1003 = vmatpush1.msra.mxu0 0.0
    %1004 = vmatprep.subr.mxu0 0.0
    %1005 = vmatpush1.msra.mxu0 0.0
    %1006 = vmatprep.subr.mxu0 0.0
    %1007 = vmatpush1.msra.mxu0 0.0
    %1008 = vmatprep.subr.mxu0 0.0
    %1009 = vmatpush1.msra.mxu0 0.0
    %1010 = vmatprep.subr.mxu0 0.0
    %1011 = vmatpush1.msra.mxu0 0.0
    %1012 = vmatprep.subr.mxu0 0.0
    %1013 = vmatpush1.msra.mxu0 0.0
    %1014 = vmatprep.subr.mxu0 0.0
    %1015 = vmatpush1.msra.mxu0 0.0
    %1016 = vmatprep.subr.mxu0 0.0
    %1017 = vmatpush1.msra.mxu0 0.0
    %1018 = vmatprep.subr.mxu0 0.0
    %1019 = vmatpush1.msra.mxu0 0.0
    %1020 = vmatprep.subr.mxu0 0.0
    %1021 = vmatpush1.msra.mxu0 0.0
    %1022 = vmatprep.subr.mxu0 0.0
    %1023 = vmatpush1.msra.mxu0 0.0
    %1024 = vmatprep.subr.mxu0 0.0
    %1025 = vmatpush1.msra.mxu0 0.0
    %1026 = vmatprep.subr.mxu0 0.0
    %1027 = vmatpush1.msra.mxu0 0.0
    %1028 = vmatprep.subr.mxu0 0.0
    %1029 = vmatpush1.msra.mxu0 0.0
    %1030 = vmatprep.subr.mxu0 0.0
    %1031 = vmatpush1.msra.mxu0 0.0
    %1032 = vmatprep.subr.mxu0 0.0
    %1033 = vmatpush1.msra.mxu0 0.0
    %1034 = vmatprep.mubr.f32.mxu0 0.0
    %1035 = vmatmul.mubr.f32.gmra.mrb[0].mxu0 %v968
    %v1036 = vpop.f32.mrb[0].mxu0
    %v1037 = vadd.f32 0.0, %v1036
    %v1038 = vpop.f32.mrb[0].mxu0
    %1039 = vdwg.mxu0
    %v1040 = vld [vmem:[%s616] sm:$0x3]
    %v1041 = vadd.f32 %v1040, %v1037
    %v1042 = vld [vmem:[%s613] sm:$0x3]
    %v1043 = vadd.f32 %v1042, %v1037
    %v1044 = vxor.u32 %v1041, 2147483648
    %v1045 = vmul.f32 %v1044, 1.442695
    %v1046 = vpow.pop %v1045
    %v1047 = vadd.f32 %v1046, 1.0
    %v1048 = vrcp.pop %v1047
    %v1049 = vmul.f32 1.0, %v1048
    %v1050 = vtanh.pop %v1041
    %v1051 = vmul.f32 %v1049, %v920
    %1053 = vrot.lane.b32.xlu0 %v1050, 96
    %v1054 = vpop.permute.xlu0 %1053
    %v1056 = vmul.f32 %v1049, %v1054
    %1058 = vrot.lane.b32.xlu0 %v1056, 16
    %v1059 = vpop.permute.xlu0 %1058
    %v1061 = vadd.f32 %v1051, %v1059
    %v1062 = vtanh.pop %v1061
    %1064 = vrot.lane.b32.xlu0 %v1062, 32
    %v1065 = vpop.permute.xlu0 %1064
    %v1067 = vmul.f32 %v1049, %v1065
    %v1068 = vxor.u32 %v1043, 2147483648
    %v1069 = vmul.f32 %v1068, 1.442695
    %v1070 = vpow.pop %v1069
    %v1071 = vadd.f32 %v1070, 1.0
    %v1072 = vrcp.pop %v1071
    %v1073 = vmul.f32 1.0, %v1072
    %v1074 = vtanh.pop %v1043
    %v1075 = vmul.f32 %v1073, %v944
    %1077 = vrot.lane.b32.xlu0 %v1074, 96
    %v1078 = vpop.permute.xlu0 %1077
    %v1080 = vmul.f32 %v1073, %v1078
    %1082 = vrot.lane.b32.xlu0 %v1080, 16
    %v1083 = vpop.permute.xlu0 %1082
    %v1085 = vadd.f32 %v1075, %v1083
    %v1086 = vtanh.pop %v1085
    %1088 = vrot.lane.b32.xlu0 %v1086, 32
    %v1089 = vpop.permute.xlu0 %1088
    %v1091 = vmul.f32 %v1073, %v1089
    %1093 = vrot.lane.b32.xlu0 %v1067, 80
    %v1094 = vpop.permute.xlu0 %1093
    %s1096 = scalar_lea.vmem [#allocation3], 10
    %1097 = vst.msk [vmem:[%s1096] sm:$0x3] %vm385, %v1094
    %1099 = vrot.lane.b32.xlu0 %v1091, 16
    %v1100 = vpop.permute.xlu0 %1099
    %s1102 = scalar_lea.vmem [#allocation4], 4
    %1103 = vst.msk [vmem:[%s1102] sm:$0x3] %vm385, %v1100
    %1104 = vrot.lane.b32.xlu0 %v1091, 32
    %v1105 = vpop.permute.xlu0 %1104
    %v1107 = vsel %vm122, %v1094, %v1105
    %v1109 = vsel %vm254, %v1107, 0
    %1111 = vmatprep.subr.mxu0 0.0
    %1112 = vmatpush1.msra.mxu0 %v61
    %1113 = vmatprep.subr.mxu0 0.0
    %1114 = vmatpush1.msra.mxu0 %v62
    %1115 = vmatprep.subr.mxu0 0.0
    %1116 = vmatpush1.msra.mxu0 %v63
    %1117 = vmatprep.subr.mxu0 0.0
    %1118 = vmatpush1.msra.mxu0 %v64
    %1119 = vmatprep.subr.mxu0 0.0
    %1120 = vmatpush1.msra.mxu0 0.0
    %1121 = vmatprep.subr.mxu0 0.0
    %1122 = vmatpush1.msra.mxu0 0.0
    %1123 = vmatprep.subr.mxu0 0.0
    %1124 = vmatpush1.msra.mxu0 0.0
    %1125 = vmatprep.subr.mxu0 0.0
    %1126 = vmatpush1.msra.mxu0 0.0
    %1127 = vmatprep.subr.mxu0 0.0
    %1128 = vmatpush1.msra.mxu0 0.0
    %1129 = vmatprep.subr.mxu0 0.0
    %1130 = vmatpush1.msra.mxu0 0.0
    %1131 = vmatprep.subr.mxu0 0.0
    %1132 = vmatpush1.msra.mxu0 0.0
    %1133 = vmatprep.subr.mxu0 0.0
    %1134 = vmatpush1.msra.mxu0 0.0
    %1135 = vmatprep.subr.mxu0 0.0
    %1136 = vmatpush1.msra.mxu0 0.0
    %1137 = vmatprep.subr.mxu0 0.0
    %1138 = vmatpush1.msra.mxu0 0.0
    %1139 = vmatprep.subr.mxu0 0.0
    %1140 = vmatpush1.msra.mxu0 0.0
    %1141 = vmatprep.subr.mxu0 0.0
    %1142 = vmatpush1.msra.mxu0 0.0
    %1143 = vmatprep.subr.mxu0 0.0
    %1144 = vmatpush1.msra.mxu0 0.0
    %1145 = vmatprep.subr.mxu0 0.0
    %1146 = vmatpush1.msra.mxu0 0.0
    %1147 = vmatprep.subr.mxu0 0.0
    %1148 = vmatpush1.msra.mxu0 0.0
    %1149 = vmatprep.subr.mxu0 0.0
    %1150 = vmatpush1.msra.mxu0 0.0
    %1151 = vmatprep.subr.mxu0 0.0
    %1152 = vmatpush1.msra.mxu0 0.0
    %1153 = vmatprep.subr.mxu0 0.0
    %1154 = vmatpush1.msra.mxu0 0.0
    %1155 = vmatprep.subr.mxu0 0.0
    %1156 = vmatpush1.msra.mxu0 0.0
    %1157 = vmatprep.subr.mxu0 0.0
    %1158 = vmatpush1.msra.mxu0 0.0
    %1159 = vmatprep.subr.mxu0 0.0
    %1160 = vmatpush1.msra.mxu0 0.0
    %1161 = vmatprep.subr.mxu0 0.0
    %1162 = vmatpush1.msra.mxu0 0.0
    %1163 = vmatprep.subr.mxu0 0.0
    %1164 = vmatpush1.msra.mxu0 0.0
    %1165 = vmatprep.subr.mxu0 0.0
    %1166 = vmatpush1.msra.mxu0 0.0
    %1167 = vmatprep.subr.mxu0 0.0
    %1168 = vmatpush1.msra.mxu0 0.0
    %1169 = vmatprep.subr.mxu0 0.0
    %1170 = vmatpush1.msra.mxu0 0.0
    %1171 = vmatprep.subr.mxu0 0.0
    %1172 = vmatpush1.msra.mxu0 0.0
    %1173 = vmatprep.subr.mxu0 0.0
    %1174 = vmatpush1.msra.mxu0 0.0
    %1175 = vmatprep.mubr.f32.mxu0 0.0
    %1176 = vmatmul.mubr.f32.gmra.mrb[0].mxu0 %v1109
    %v1177 = vpop.f32.mrb[0].mxu0
    %v1178 = vadd.f32 0.0, %v1177
    %v1179 = vpop.f32.mrb[0].mxu0
    %1180 = vdwg.mxu0
    %v1181 = vld [vmem:[%s473] sm:$0x3]
    %v1182 = vadd.f32 %v1181, %v1178
    %v1183 = vld [vmem:[%s470] sm:$0x3]
    %v1184 = vadd.f32 %v1183, %v1178
    %v1185 = vxor.u32 %v1182, 2147483648
    %v1186 = vmul.f32 %v1185, 1.442695
    %v1187 = vpow.pop %v1186
    %v1188 = vadd.f32 %v1187, 1.0
    %v1189 = vrcp.pop %v1188
    %v1190 = vmul.f32 1.0, %v1189
    %v1191 = vtanh.pop %v1182
    %v1192 = vmul.f32 %v1190, %v1061
    %1194 = vrot.lane.b32.xlu0 %v1191, 96
    %v1195 = vpop.permute.xlu0 %1194
    %v1197 = vmul.f32 %v1190, %v1195
    %1199 = vrot.lane.b32.xlu0 %v1197, 16
    %v1200 = vpop.permute.xlu0 %1199
    %v1202 = vadd.f32 %v1192, %v1200
    %v1203 = vtanh.pop %v1202
    %1205 = vrot.lane.b32.xlu0 %v1203, 32
    %v1206 = vpop.permute.xlu0 %1205
    %v1208 = vmul.f32 %v1190, %v1206
    %v1209 = vxor.u32 %v1184, 2147483648
    %v1210 = vmul.f32 %v1209, 1.442695
    %v1211 = vpow.pop %v1210
    %v1212 = vadd.f32 %v1211, 1.0
    %v1213 = vrcp.pop %v1212
    %v1214 = vmul.f32 1.0, %v1213
    %v1215 = vtanh.pop %v1184
    %v1216 = vmul.f32 %v1214, %v1085
    %1218 = vrot.lane.b32.xlu0 %v1215, 96
    %v1219 = vpop.permute.xlu0 %1218
    %v1221 = vmul.f32 %v1214, %v1219
    %1223 = vrot.lane.b32.xlu0 %v1221, 16
    %v1224 = vpop.permute.xlu0 %1223
    %v1226 = vadd.f32 %v1216, %v1224
    %v1227 = vtanh.pop %v1226
    %1229 = vrot.lane.b32.xlu0 %v1227, 32
    %v1230 = vpop.permute.xlu0 %1229
    %v1232 = vmul.f32 %v1214, %v1230
    %1234 = vrot.lane.b32.xlu0 %v1208, 80
    %v1235 = vpop.permute.xlu0 %1234
    %s1237 = scalar_lea.vmem [#allocation3], 12
    %1238 = vst.msk [vmem:[%s1237] sm:$0x3] %vm385, %v1235
    %1240 = vrot.lane.b32.xlu0 %v1232, 16
    %v1241 = vpop.permute.xlu0 %1240
    %s1243 = scalar_lea.vmem [#allocation4], 2
    %1244 = vst.msk [vmem:[%s1243] sm:$0x3] %vm385, %v1241
    %1245 = vrot.lane.b32.xlu0 %v1232, 32
    %v1246 = vpop.permute.xlu0 %1245
    %v1248 = vsel %vm122, %v1235, %v1246
    %v1250 = vsel %vm254, %v1248, 0
    %1252 = vmatprep.subr.mxu0 0.0
    %1253 = vmatpush1.msra.mxu0 %v61
    %1254 = vmatprep.subr.mxu0 0.0
    %1255 = vmatpush1.msra.mxu0 %v62
    %1256 = vmatprep.subr.mxu0 0.0
    %1257 = vmatpush1.msra.mxu0 %v63
    %1258 = vmatprep.subr.mxu0 0.0
    %1259 = vmatpush1.msra.mxu0 %v64
    %1260 = vmatprep.subr.mxu0 0.0
    %1261 = vmatpush1.msra.mxu0 0.0
    %1262 = vmatprep.subr.mxu0 0.0
    %1263 = vmatpush1.msra.mxu0 0.0
    %1264 = vmatprep.subr.mxu0 0.0
    %1265 = vmatpush1.msra.mxu0 0.0
    %1266 = vmatprep.subr.mxu0 0.0
    %1267 = vmatpush1.msra.mxu0 0.0
    %1268 = vmatprep.subr.mxu0 0.0
    %1269 = vmatpush1.msra.mxu0 0.0
    %1270 = vmatprep.subr.mxu0 0.0
    %1271 = vmatpush1.msra.mxu0 0.0
    %1272 = vmatprep.subr.mxu0 0.0
    %1273 = vmatpush1.msra.mxu0 0.0
    %1274 = vmatprep.subr.mxu0 0.0
    %1275 = vmatpush1.msra.mxu0 0.0
    %1276 = vmatprep.subr.mxu0 0.0
    %1277 = vmatpush1.msra.mxu0 0.0
    %1278 = vmatprep.subr.mxu0 0.0
    %1279 = vmatpush1.msra.mxu0 0.0
    %1280 = vmatprep.subr.mxu0 0.0
    %1281 = vmatpush1.msra.mxu0 0.0
    %1282 = vmatprep.subr.mxu0 0.0
    %1283 = vmatpush1.msra.mxu0 0.0
    %1284 = vmatprep.subr.mxu0 0.0
    %1285 = vmatpush1.msra.mxu0 0.0
    %1286 = vmatprep.subr.mxu0 0.0
    %1287 = vmatpush1.msra.mxu0 0.0
    %1288 = vmatprep.subr.mxu0 0.0
    %1289 = vmatpush1.msra.mxu0 0.0
    %1290 = vmatprep.subr.mxu0 0.0
    %1291 = vmatpush1.msra.mxu0 0.0
    %1292 = vmatprep.subr.mxu0 0.0
    %1293 = vmatpush1.msra.mxu0 0.0
    %1294 = vmatprep.subr.mxu0 0.0
    %1295 = vmatpush1.msra.mxu0 0.0
    %1296 = vmatprep.subr.mxu0 0.0
    %1297 = vmatpush1.msra.mxu0 0.0
    %1298 = vmatprep.subr.mxu0 0.0
    %1299 = vmatpush1.msra.mxu0 0.0
    %1300 = vmatprep.subr.mxu0 0.0
    %1301 = vmatpush1.msra.mxu0 0.0
    %1302 = vmatprep.subr.mxu0 0.0
    %1303 = vmatpush1.msra.mxu0 0.0
    %1304 = vmatprep.subr.mxu0 0.0
    %1305 = vmatpush1.msra.mxu0 0.0
    %1306 = vmatprep.subr.mxu0 0.0
    %1307 = vmatpush1.msra.mxu0 0.0
    %1308 = vmatprep.subr.mxu0 0.0
    %1309 = vmatpush1.msra.mxu0 0.0
    %1310 = vmatprep.subr.mxu0 0.0
    %1311 = vmatpush1.msra.mxu0 0.0
    %1312 = vmatprep.subr.mxu0 0.0
    %1313 = vmatpush1.msra.mxu0 0.0
    %1314 = vmatprep.subr.mxu0 0.0
    %1315 = vmatpush1.msra.mxu0 0.0
    %1316 = vmatprep.mubr.f32.mxu0 0.0
    %1317 = vmatmul.mubr.f32.gmra.mrb[0].mxu0 %v1250
    %v1318 = vpop.f32.mrb[0].mxu0
    %v1319 = vadd.f32 0.0, %v1318
    %v1320 = vpop.f32.mrb[0].mxu0
    %1321 = vdwg.mxu0
    %v1322 = vld [vmem:[%s330] sm:$0x3]
    %v1323 = vadd.f32 %v1322, %v1319
    %v1324 = vld [vmem:[#allocation2] sm:$0x3]
    %v1325 = vadd.f32 %v1324, %v1319
    %v1326 = vxor.u32 %v1323, 2147483648
    %v1327 = vmul.f32 %v1326, 1.442695
    %v1328 = vpow.pop %v1327
    %v1329 = vadd.f32 %v1328, 1.0
    %v1330 = vrcp.pop %v1329
    %v1331 = vmul.f32 1.0, %v1330
    %v1332 = vtanh.pop %v1323
    %v1333 = vmul.f32 %v1331, %v1202
    %1335 = vrot.lane.b32.xlu0 %v1332, 96
    %v1336 = vpop.permute.xlu0 %1335
    %v1338 = vmul.f32 %v1331, %v1336
    %1340 = vrot.lane.b32.xlu0 %v1338, 16
    %v1341 = vpop.permute.xlu0 %1340
    %v1343 = vadd.f32 %v1333, %v1341
    %v1344 = vtanh.pop %v1343
    %1346 = vrot.lane.b32.xlu0 %v1344, 32
    %v1347 = vpop.permute.xlu0 %1346
    %v1349 = vmul.f32 %v1331, %v1347
    %v1350 = vxor.u32 %v1325, 2147483648
    %v1351 = vmul.f32 %v1350, 1.442695
    %v1352 = vpow.pop %v1351
    %v1353 = vadd.f32 %v1352, 1.0
    %v1354 = vrcp.pop %v1353
    %v1355 = vmul.f32 1.0, %v1354
    %v1356 = vtanh.pop %v1325
    %v1357 = vmul.f32 %v1355, %v1226
    %1359 = vrot.lane.b32.xlu0 %v1356, 96
    %v1360 = vpop.permute.xlu0 %1359
    %v1362 = vmul.f32 %v1355, %v1360
    %1364 = vrot.lane.b32.xlu0 %v1362, 16
    %v1365 = vpop.permute.xlu0 %1364
    %v1367 = vadd.f32 %v1357, %v1365
    %v1368 = vtanh.pop %v1367
    %1370 = vrot.lane.b32.xlu0 %v1368, 32
    %v1371 = vpop.permute.xlu0 %1370
    %v1373 = vmul.f32 %v1355, %v1371
    %1375 = vrot.lane.b32.xlu0 %v1349, 80
    %v1376 = vpop.permute.xlu0 %1375
    %s1378 = scalar_lea.vmem [#allocation3], 14
    %1379 = vst.msk [vmem:[%s1378] sm:$0x3] %vm385, %v1376
    %1381 = vrot.lane.b32.xlu0 %v1373, 16
    %v1382 = vpop.permute.xlu0 %1381
    %1384 = vst.msk [vmem:[#allocation4] sm:$0x3] %vm385, %v1382
    %v1385 = vld [vmem:[#allocation3] sm:$0x3]
    %v1386 = vld [vmem:[#allocation3 + $0x2] sm:$0x3]
    %v1387 = vld [vmem:[#allocation3 + $0x4] sm:$0x3]
    %v1388 = vld [vmem:[#allocation3 + $0x6] sm:$0x3]
    %v1389 = vld [vmem:[#allocation3 + $0x8] sm:$0x3]
    %v1390 = vld [vmem:[#allocation3 + $0xa] sm:$0x3]
    %v1391 = vld [vmem:[#allocation3 + $0xc] sm:$0x3]
    %v1392 = vld [vmem:[#allocation3 + $0xe] sm:$0x3]
    %v1393 = vld [vmem:[#allocation4] sm:$0x3]
    %v1394 = vld [vmem:[#allocation4 + $0x2] sm:$0x3]
    %v1395 = vld [vmem:[#allocation4 + $0x4] sm:$0x3]
    %v1396 = vld [vmem:[#allocation4 + $0x6] sm:$0x3]
    %v1397 = vld [vmem:[#allocation4 + $0x8] sm:$0x3]
    %v1398 = vld [vmem:[#allocation4 + $0xa] sm:$0x3]
    %v1399 = vld [vmem:[#allocation4 + $0xc] sm:$0x3]
    %v1400 = vld [vmem:[#allocation4 + $0xe] sm:$0x3]
    %1409 = vrot.lane.b32.xlu0 %v1393, 16
    %v1410 = vpop.permute.xlu0 %1409
    %1411 = vrot.lane.b32.xlu0 %v1394, 16
    %v1412 = vpop.permute.xlu0 %1411
    %1413 = vrot.lane.b32.xlu0 %v1395, 16
    %v1414 = vpop.permute.xlu0 %1413
    %1415 = vrot.lane.b32.xlu0 %v1396, 16
    %v1416 = vpop.permute.xlu0 %1415
    %1417 = vrot.lane.b32.xlu0 %v1397, 16
    %v1418 = vpop.permute.xlu0 %1417
    %1419 = vrot.lane.b32.xlu0 %v1398, 16
    %v1420 = vpop.permute.xlu0 %1419
    %1421 = vrot.lane.b32.xlu0 %v1399, 16
    %v1422 = vpop.permute.xlu0 %1421
    %1423 = vrot.lane.b32.xlu0 %v1400, 16
    %v1424 = vpop.permute.xlu0 %1423
    %v1433 = vsel %vm122, %v1385, %v1410
    %v1434 = vsel %vm122, %v1386, %v1412
    %v1435 = vsel %vm122, %v1387, %v1414
    %v1436 = vsel %vm122, %v1388, %v1416
    %v1437 = vsel %vm122, %v1389, %v1418
    %v1438 = vsel %vm122, %v1390, %v1420
    %v1439 = vsel %vm122, %v1391, %v1422
    %v1440 = vsel %vm122, %v1392, %v1424
    %vm1441 = vcmask 254976
    %1442 = vst.msk [vmem:[#allocation11] sm:$0x3] %vm1441, %v1433
    %1443 = vst.msk [vmem:[#allocation11 + $0x2] sm:$0x3] %vm1441, %v1434
    %1444 = vst.msk [vmem:[#allocation11 + $0x4] sm:$0x3] %vm1441, %v1435
    %1445 = vst.msk [vmem:[#allocation11 + $0x6] sm:$0x3] %vm1441, %v1436
    %1446 = vst.msk [vmem:[#allocation11 + $0x8] sm:$0x3] %vm1441, %v1437
    %1447 = vst.msk [vmem:[#allocation11 + $0xa] sm:$0x3] %vm1441, %v1438
    %1448 = vst.msk [vmem:[#allocation11 + $0xc] sm:$0x3] %vm1441, %v1439
    %1449 = vst.msk [vmem:[#allocation11 + $0xe] sm:$0x3] %vm1441, %v1440
    // Predicated region
    $region30: #{tpu_custom_call.1} parent=1 // pred_check
      _
    $region31: #{tpu_custom_call.1} parent=1 // pred_check_branch
      %1451 = sbr.rel (0) target = $region33
    $region32: #{tpu_custom_call.1} parent=1 // pred_region
      %s1453 = ssub.s32 256, 256
      %1454 = vsyncadd [#allocation7], %s1453
      %s1455 = sshll.u32 [#allocation11], 4
      %s1456 = int_to_ptr.vmem [resolvable:$true] %s1455
      %1461 = dma.vmem_to_hbm [thread:$0]  %s1456, 256, %s4, [#allocation7], 32, 32, 2
    $region33: #{tpu_custom_call.1} parent=1 // pred_fallthru
      _
    // Predicated region
    $region34: #{tpu_custom_call.1} parent=1 // pred_check
      _
    $region35: #{tpu_custom_call.1} parent=1 // pred_check_branch
      %1463 = sbr.rel (0) target = $region37
    $region36: #{tpu_custom_call.1} parent=1 // pred_region
      %1464 = dma.done [#allocation7], 256
    $region37: #{tpu_custom_call.1} parent=1 // pred_fallthru
      _
    %1465 = vsyncpa [#allocation6], 1
    %1466 = vsyncpa [#allocation9], 1
    %1467 = vsyncpa [#allocation7], 1

</llo_original>
